<compile_context>
chip_gen: v6e
topology: v6e:2x2x1
jax: 0.10.0
libtpu: 0.0.40
codegen_flags: <defaults>
</compile_context>

<pallas_src>
import jax
import jax.numpy as jnp
from jax.experimental import pallas as pl
from jax.experimental.pallas import tpu as pltpu

C1PAD = 16        # conv1 out channels padded 10 -> 16 (compact bf16 lanes)
C2PAD = 32        # conv2 out channels padded 20 -> 32
FC1PAD = 64       # fc1 hidden padded 50 -> 64
NLOGPAD = 16      # logits padded 10 -> 16
NEG = -1e30       # "-inf" logit padding for the fused log_softmax
MAX_TILE_ROWS = 4096   # bf16 row tiles stay tiny in VMEM on v5e/v6e/v7x


def _round_up(x, m):
    return (x + m - 1) // m * m


def _plan_rows(n_items, rows_per_item):
    """Row-tile planner: image-aligned, multiple of 16 (bf16 sublane packing),
    and >= 2 tiles whenever there are >= 2 items so both v7x TCs get work."""
    total = n_items * rows_per_item
    cap_items = max(1, MAX_TILE_ROWS // rows_per_item)
    want_items = max(1, -(-n_items // 2))            # ceil(n/2)
    tile_items = min(cap_items, want_items)
    tile_rows = _round_up(tile_items * rows_per_item, 16)
    return tile_rows, _round_up(total, tile_rows)


# ----------------------------- Pallas kernels ------------------------------

def _conv_pool_relu_kernel(p_ref, w_ref, b_ref, o_ref):
    # p: (TM, K) bf16 -- one 6x6*Cin input window per 2x2-pool output location
    # w: (K, 4*C) bf16 -- conv weights embedded at the 4 pool offsets
    # b: (1, C) f32, o: (TM, C) bf16 = relu(maxpool(conv) + bias)
    acc = jnp.dot(p_ref[...], w_ref[...], preferred_element_type=jnp.float32)
    c = o_ref.shape[1]
    pooled = jnp.maximum(jnp.maximum(acc[:, 0 * c:1 * c], acc[:, 1 * c:2 * c]),
                         jnp.maximum(acc[:, 2 * c:3 * c], acc[:, 3 * c:4 * c]))
    # The 4 window positions share the bias, so bias-after-max == conv->pool.
    o_ref[...] = jnp.maximum(pooled + b_ref[...], 0.0).astype(o_ref.dtype)


def _fc_kernel(x_ref, w1_ref, b1_ref, w2_ref, b2_ref, o_ref):
    # fc1 + ReLU + fc2 + log_softmax, all VMEM-resident (one small HBM write).
    h = jnp.dot(x_ref[...], w1_ref[...], preferred_element_type=jnp.float32)
    h = jnp.maximum(h + b1_ref[...], 0.0).astype(w2_ref.dtype)
    logits = jnp.dot(h, w2_ref[...], preferred_element_type=jnp.float32)
    logits = logits + b2_ref[...]           # padded lanes carry -1e30 -> exp()=0
    m = jnp.max(logits, axis=-1, keepdims=True)
    s = logits - m
    lse = jnp.log(jnp.sum(jnp.exp(s), axis=-1, keepdims=True))
    o_ref[...] = s - lse


_CPARAMS = pltpu.CompilerParams(dimension_semantics=("parallel",))


# --------------------------- pallas_call wrappers ---------------------------

def conv_pool_relu(patches, w, b, cout_pad, rows_per_item, n_items):
    """patches: (M, 36*Cin) bf16 -> (M, cout_pad) bf16 = relu(pool(conv))."""
    M, K = patches.shape
    tile_rows, m_pad = _plan_rows(n_items, rows_per_item)
    if m_pad != M:
        patches = jnp.pad(patches, ((0, m_pad - M), (0, 0)))
    out = pl.pallas_call(
        _conv_pool_relu_kernel,
        out_shape=jax.ShapeDtypeStruct((m_pad, cout_pad), jnp.bfloat16),
        grid_spec=pltpu.PrefetchScalarGridSpec(
            num_scalar_prefetch=0,
            grid=(m_pad // tile_rows,),
            in_specs=[pl.BlockSpec((tile_rows, K), lambda i: (i, 0)),
                      pl.BlockSpec((K, 4 * cout_pad), lambda i: (0, 0)),
                      pl.BlockSpec((1, cout_pad), lambda i: (0, 0))],
            out_specs=pl.BlockSpec((tile_rows, cout_pad), lambda i: (i, 0))),
        compiler_params=_CPARAMS,
    )(patches, w, b)
    return out[:M]


def fc_block(x, w1, b1, w2, b2):
    """x: (B, 512) bf16 -> (B, 10) f32 log-probabilities."""
    B, K = x.shape
    tile_rows, m_pad = _plan_rows(B, 1)
    if m_pad != B:
        x = jnp.pad(x, ((0, m_pad - B), (0, 0)))
    out = pl.pallas_call(
        _fc_kernel,
        out_shape=jax.ShapeDtypeStruct((m_pad, NLOGPAD), jnp.float32),
        grid_spec=pltpu.PrefetchScalarGridSpec(
            num_scalar_prefetch=0,
            grid=(m_pad // tile_rows,),
            in_specs=[pl.BlockSpec((tile_rows, K), lambda i: (i, 0)),
                      pl.BlockSpec((K, FC1PAD), lambda i: (0, 0)),
                      pl.BlockSpec((1, FC1PAD), lambda i: (0, 0)),
                      pl.BlockSpec((FC1PAD, NLOGPAD), lambda i: (0, 0)),
                      pl.BlockSpec((1, NLOGPAD), lambda i: (0, 0))],
            out_specs=pl.BlockSpec((tile_rows, NLOGPAD), lambda i: (i, 0))),
        compiler_params=_CPARAMS,
    )(x, w1, b1, w2, b2)
    return out[:B, :10]


# ------------------------------- JAX glue -----------------------------------

def pooled_patches(x_nhwc):
    """(B,H,W,C) -> ((B*Hp*Wp, 36*C) bf16, (Hp,Wp)).

    Row r = (b, hp, wp) holds the 6x6 input window feeding the 2x2 maxpool
    output at (hp, wp); entries ordered (i, j, c) -- 36 spatial slices only,
    channels kept in the last dim (weight matrices match this ordering)."""
    B, H, W, C = x_nhwc.shape
    hp, wp = (H - 4) // 2, (W - 4) // 2
    cols = [x_nhwc[:, i:i + 2 * hp - 1:2, j:j + 2 * wp - 1:2, :]
            for i in range(6) for j in range(6)]
    patches = jnp.concatenate(cols, axis=-1)            # (B, hp, wp, 36*C)
    return patches.reshape(B * hp * wp, 36 * C).astype(jnp.bfloat16), (hp, wp)


def _pool_conv_weight(w_oihw, cin_pad, cout_pad):
    """PyTorch (O, Cin, 5, 5) conv weight -> (36*cin_pad, 4*cout_pad) matrix.

    Column block p = 2*dy+dx holds the 5x5 weights embedded at offset (dy,dx)
    inside the 6x6 pool-window patch, so patch @ W yields all four conv
    outputs of one maxpool window from a single matmul."""
    O, Cin, k, _ = w_oihw.shape
    w_hwco = jnp.transpose(w_oihw.astype(jnp.float32), (2, 3, 1, 0))  # (5,5,Cin,O)
    out = jnp.zeros((6, 6, cin_pad, 4, cout_pad), jnp.float32)
    for dy in range(2):
        for dx in range(2):
            p = 2 * dy + dx
            out = out.at[dy:dy + k, dx:dx + k, :Cin, p, :O].set(w_hwco)
    return out.reshape(36 * cin_pad, 4 * cout_pad)


def prepare_params(params):
    """One-time weight reshape/pad/cast into the kernel layouts (bf16)."""
    bf = lambda a: a.astype(jnp.bfloat16)

    w1 = _pool_conv_weight(params["conv1_w"], 1, C1PAD)        # (36, 64)
    w2 = _pool_conv_weight(params["conv2_w"], C1PAD, C2PAD)    # (576, 128)
    b1 = jnp.zeros((1, C1PAD), jnp.float32).at[0, :10].set(params["conv1_b"])
    b2 = jnp.zeros((1, C2PAD), jnp.float32).at[0, :20].set(params["conv2_b"])

    # fc1: fold PyTorch's NCHW x.view(-1, 320) flatten into the weight rows:
    # our conv2 activation flattens as (h, w, cpad) with cpad = 32 -> K = 512.
    f1 = params["fc1_w"].astype(jnp.float32).reshape(50, 20, 4, 4)   # (o,c,h,w)
    f1 = jnp.transpose(f1, (2, 3, 1, 0))                             # (h,w,c,o)
    f1 = jnp.pad(f1, ((0, 0), (0, 0), (0, C2PAD - 20), (0, FC1PAD - 50)))
    f1 = f1.reshape(16 * C2PAD, FC1PAD)                              # (512, 64)
    f1b = jnp.zeros((1, FC1PAD), jnp.float32).at[0, :50].set(params["fc1_b"])

    f2 = jnp.pad(params["fc2_w"].astype(jnp.float32).T,
                 ((0, FC1PAD - 50), (0, NLOGPAD - 10)))              # (64, 16)
    f2b = jnp.full((1, NLOGPAD), NEG, jnp.float32)
    f2b = f2b.at[0, :10].set(params["fc2_b"].astype(jnp.float32))

    return {"w1": bf(w1), "b1": b1, "w2": bf(w2), "b2": b2,
            "f1w": bf(f1), "f1b": f1b, "f2w": bf(f2), "f2b": f2b}


def net_forward(x_nchw, prep):
    B = x_nchw.shape[0]
    x = jnp.transpose(x_nchw, (0, 2, 3, 1)).astype(jnp.float32)   # (B,28,28,1)

    # ---- conv1 (1->10, k=5) + maxpool2 + relu: one matmul kernel ----
    p1, (hp1, wp1) = pooled_patches(x)                       # (B*144, 36) bf16
    y1 = conv_pool_relu(p1, prep["w1"], prep["b1"], C1PAD, hp1 * wp1, B)
    y1 = y1.reshape(B, hp1, wp1, C1PAD)                      # (B,12,12,16), 10 real

    # ---- conv2 (10->20, k=5) + maxpool2 + relu: one matmul kernel ----
    p2, (hp2, wp2) = pooled_patches(y1)                      # (B*16, 576) bf16
    y2 = conv_pool_relu(p2, prep["w2"], prep["b2"], C2PAD, hp2 * wp2, B)

    # Flatten: fc1 weight rows were permuted to the (h, w, cpad) order, so the
    # PyTorch x.view(-1, 320) is just this metadata reshape (no transpose).
    flat = y2.reshape(B, hp2 * wp2 * C2PAD)                  # (B, 512) bf16

    # TODO(synk): nn.Dropout2d is identity in eval mode; training-mode channel
    # dropout (RNG mask + 1/(1-p) scale) is intentionally not implemented.

    # ---- fc1 + relu + fc2 + log_softmax: one fused kernel ----
    return fc_block(flat, prep["f1w"], prep["f1b"], prep["f2w"], prep["f2b"])


# ----------------------- pure-JAX reference (for check) ---------------------

def reference_forward(x_nchw, params):
    hi = jax.lax.Precision.HIGHEST
    y = jax.lax.conv_general_dilated(
        x_nchw, params["conv1_w"], (1, 1), "VALID",
        dimension_numbers=("NCHW", "OIHW", "NCHW"), precision=hi)
    y = y + params["conv1_b"].reshape(1, -1, 1, 1)
    y = jax.lax.reduce_window(y, -jnp.inf, jax.lax.max,
                              (1, 1, 2, 2), (1, 1, 2, 2), "VALID")
    y = jnp.maximum(y, 0.0)
    y = jax.lax.conv_general_dilated(
        y, params["conv2_w"], (1, 1), "VALID",
        dimension_numbers=("NCHW", "OIHW", "NCHW"), precision=hi)
    y = y + params["conv2_b"].reshape(1, -1, 1, 1)
    y = jax.lax.reduce_window(y, -jnp.inf, jax.lax.max,
                              (1, 1, 2, 2), (1, 1, 2, 2), "VALID")
    y = jnp.maximum(y, 0.0)
    y = y.reshape(y.shape[0], -1)                            # NCHW flatten == view(-1,320)
    y = jnp.maximum(jnp.dot(y, params["fc1_w"].T, precision=hi) + params["fc1_b"], 0.0)
    y = jnp.dot(y, params["fc2_w"].T, precision=hi) + params["fc2_b"]
    return jax.nn.log_softmax(y, axis=1)


def init_params(key):
    ks = jax.random.split(key, 8)

    def rnd(k, shape, scale):
        return (scale * jax.random.normal(k, shape)).astype(jnp.float32)

    return {
        "conv1_w": rnd(ks[0], (10, 1, 5, 5), 0.10),   # PyTorch layout (O, C, kh, kw)
        "conv1_b": rnd(ks[1], (10,), 0.10),
        "conv2_w": rnd(ks[2], (20, 10, 5, 5), 0.05),
        "conv2_b": rnd(ks[3], (20,), 0.05),
        "fc1_w":   rnd(ks[4], (50, 320), 0.05),       # PyTorch layout (out, in)
        "fc1_b":   rnd(ks[5], (50,), 0.05),
        "fc2_w":   rnd(ks[6], (10, 50), 0.10),
        "fc2_b":   rnd(ks[7], (10,), 0.10),
    }


if __name__ == "__main__":
    key = jax.random.PRNGKey(0)
    pkey, xkey = jax.random.split(key)
    params = init_params(pkey)
    prep = prepare_params(params)        # one-time weight prep (hoisted out of forward)

    # 28x28 single-channel input is required by the hard-coded 320 flatten.
    x = jax.random.normal(xkey, (2, 1, 28, 28), dtype=jnp.float32)

    out = jax.jit(net_forward)(x, prep)
    out = jax.block_until_ready(out)

    assert out.shape == (2, 10), out.shape
    assert bool(jnp.all(jnp.isfinite(out))), "non-finite output"
    # log_softmax rows must exponentiate-sum to ~1.
    assert jnp.allclose(jnp.sum(jnp.exp(out), axis=1), 1.0, atol=1e-4)

    # Numerical check: f32 reference evaluated on bf16-rounded input/params
    # (the kernel path keeps activations in bf16 with f32 accumulation).
    rb = lambda t: jax.tree_util.tree_map(
        lambda a: a.astype(jnp.bfloat16).astype(jnp.float32), t)
    ref = reference_forward(rb(x), rb(params))
    max_err = float(jnp.max(jnp.abs(out - ref)))
    assert max_err < 3e-2, f"mismatch vs reference: max abs err {max_err}"

    print("KERNEL_OK")
</pallas_src>

<mosaic_0001>
module attributes {stable_mosaic.version = 11 : i64} {
  func.func @_conv_pool_relu_kernel(%arg0: i32, %arg1: memref<144x36xbf16, #tpu.memory_space<vmem>>, %arg2: memref<36x64xbf16, #tpu.memory_space<vmem>>, %arg3: memref<1x16xf32, #tpu.memory_space<vmem>>, %arg4: memref<144x16xbf16, #tpu.memory_space<vmem>>) attributes {dimension_semantics = [#tpu.dimension_semantics<parallel>], iteration_bounds = array<i64: 2>, scalar_prefetch = 0 : i64, scratch_operands = 0 : i64, tpu.core_type = #tpu.core_type<tc>, window_params = [{transform_indices = @transform_0, window_bounds = array<i64: 144, 36>}, {pipeline_mode = #tpu.pipeline_mode<synchronous>, transform_indices = @transform_1, window_bounds = array<i64: 36, 64>}, {pipeline_mode = #tpu.pipeline_mode<synchronous>, transform_indices = @transform_2, window_bounds = array<i64: 1, 16>}, {transform_indices = @transform_3, window_bounds = array<i64: 144, 16>}]} {
    %c0 = arith.constant 0 : index
    %c0_0 = arith.constant 0 : index
    %0 = vector.load %arg1[%c0, %c0_0] : memref<144x36xbf16, #tpu.memory_space<vmem>>, vector<144x36xbf16>
    %c0_1 = arith.constant 0 : index
    %c0_2 = arith.constant 0 : index
    %1 = vector.load %arg2[%c0_1, %c0_2] : memref<36x64xbf16, #tpu.memory_space<vmem>>, vector<36x64xbf16>
    %cst = arith.constant dense<0.000000e+00> : vector<144x64xf32>
    %2 = tpu.matmul %0, %1, %cst {dimension_numbers = #tpu.dot_dimension_numbers<[1], [0], [0], [1], [0, 0, 1, 1], [], []>} : vector<144x36xbf16>, vector<36x64xbf16>, vector<144x64xf32> -> vector<144x64xf32>
    %3 = vector.extract_strided_slice %2 {offsets = [0, 0], sizes = [144, 16], strides = [1, 1]} : vector<144x64xf32> to vector<144x16xf32>
    %4 = vector.extract_strided_slice %2 {offsets = [0, 16], sizes = [144, 16], strides = [1, 1]} : vector<144x64xf32> to vector<144x16xf32>
    %5 = arith.maximumf %3, %4 : vector<144x16xf32>
    %6 = vector.extract_strided_slice %2 {offsets = [0, 32], sizes = [144, 16], strides = [1, 1]} : vector<144x64xf32> to vector<144x16xf32>
    %7 = vector.extract_strided_slice %2 {offsets = [0, 48], sizes = [144, 16], strides = [1, 1]} : vector<144x64xf32> to vector<144x16xf32>
    %8 = arith.maximumf %6, %7 : vector<144x16xf32>
    %9 = arith.maximumf %5, %8 : vector<144x16xf32>
    %c0_3 = arith.constant 0 : index
    %c0_4 = arith.constant 0 : index
    %10 = vector.load %arg3[%c0_3, %c0_4] : memref<1x16xf32, #tpu.memory_space<vmem>>, vector<1x16xf32>
    %11 = vector.broadcast %10 : vector<1x16xf32> to vector<144x16xf32>
    %12 = arith.addf %9, %11 : vector<144x16xf32>
    %cst_5 = arith.constant 0.000000e+00 : f32
    %13 = vector.broadcast %cst_5 : f32 to vector<144x16xf32>
    %14 = arith.maximumf %12, %13 : vector<144x16xf32>
    %15 = arith.truncf %14 : vector<144x16xf32> to vector<144x16xbf16>
    %c0_6 = arith.constant 0 : index
    %c0_7 = arith.constant 0 : index
    %16 = vector.load %arg4[%c0_6, %c0_7] : memref<144x16xbf16, #tpu.memory_space<vmem>>, vector<144x16xbf16>
    tpu.vector_store %arg4[%c0_6, %c0_7], %15 {strides = array<i32>} : memref<144x16xbf16, #tpu.memory_space<vmem>>, vector<144x16xbf16>,
    return
  }
  func.func @transform_0(%arg0: i32) -> (i32, i32) {
    %c0_i32 = arith.constant 0 : i32
    %c0_i32_0 = arith.constant 0 : i32
    return %arg0, %c0_i32 : i32, i32
  }
  func.func @transform_1(%arg0: i32) -> (i32, i32) {
    %c0_i32 = arith.constant 0 : i32
    %c0_i32_0 = arith.constant 0 : i32
    %c0_i32_1 = arith.constant 0 : i32
    return %c0_i32, %c0_i32_0 : i32, i32
  }
  func.func @transform_2(%arg0: i32) -> (i32, i32) {
    %c0_i32 = arith.constant 0 : i32
    %c0_i32_0 = arith.constant 0 : i32
    %c0_i32_1 = arith.constant 0 : i32
    return %c0_i32, %c0_i32_0 : i32, i32
  }
  func.func @transform_3(%arg0: i32) -> (i32, i32) {
    %c0_i32 = arith.constant 0 : i32
    %c0_i32_0 = arith.constant 0 : i32
    return %arg0, %c0_i32 : i32, i32
  }
}

module attributes {stable_mosaic.version = 11 : i64} {
  func.func @_fc_kernel(%arg0: i32, %arg1: memref<16x512xbf16, #tpu.memory_space<vmem>>, %arg2: memref<512x64xbf16, #tpu.memory_space<vmem>>, %arg3: memref<1x64xf32, #tpu.memory_space<vmem>>, %arg4: memref<64x16xbf16, #tpu.memory_space<vmem>>, %arg5: memref<1x16xf32, #tpu.memory_space<vmem>>, %arg6: memref<16x16xf32, #tpu.memory_space<vmem>>) attributes {dimension_semantics = [#tpu.dimension_semantics<parallel>], iteration_bounds = array<i64: 1>, scalar_prefetch = 0 : i64, scratch_operands = 0 : i64, tpu.core_type = #tpu.core_type<tc>, window_params = [{transform_indices = @transform_0, window_bounds = array<i64: 16, 512>}, {pipeline_mode = #tpu.pipeline_mode<synchronous>, transform_indices = @transform_1, window_bounds = array<i64: 512, 64>}, {pipeline_mode = #tpu.pipeline_mode<synchronous>, transform_indices = @transform_2, window_bounds = array<i64: 1, 64>}, {pipeline_mode = #tpu.pipeline_mode<synchronous>, transform_indices = @transform_3, window_bounds = array<i64: 64, 16>}, {pipeline_mode = #tpu.pipeline_mode<synchronous>, transform_indices = @transform_4, window_bounds = array<i64: 1, 16>}, {transform_indices = @transform_5, window_bounds = array<i64: 16, 16>}]} {
    %c0 = arith.constant 0 : index
    %c0_0 = arith.constant 0 : index
    %0 = vector.load %arg1[%c0, %c0_0] : memref<16x512xbf16, #tpu.memory_space<vmem>>, vector<16x512xbf16>
    %c0_1 = arith.constant 0 : index
    %c0_2 = arith.constant 0 : index
    %1 = vector.load %arg2[%c0_1, %c0_2] : memref<512x64xbf16, #tpu.memory_space<vmem>>, vector<512x64xbf16>
    %cst = arith.constant dense<0.000000e+00> : vector<16x64xf32>
    %2 = tpu.matmul %0, %1, %cst {dimension_numbers = #tpu.dot_dimension_numbers<[1], [0], [0], [1], [0, 0, 1, 1], [], []>} : vector<16x512xbf16>, vector<512x64xbf16>, vector<16x64xf32> -> vector<16x64xf32>
    %c0_3 = arith.constant 0 : index
    %c0_4 = arith.constant 0 : index
    %3 = vector.load %arg3[%c0_3, %c0_4] : memref<1x64xf32, #tpu.memory_space<vmem>>, vector<1x64xf32>
    %4 = vector.broadcast %3 : vector<1x64xf32> to vector<16x64xf32>
    %5 = arith.addf %2, %4 : vector<16x64xf32>
    %cst_5 = arith.constant 0.000000e+00 : f32
    %6 = vector.broadcast %cst_5 : f32 to vector<16x64xf32>
    %7 = arith.maximumf %5, %6 : vector<16x64xf32>
    %8 = arith.truncf %7 : vector<16x64xf32> to vector<16x64xbf16>
    %c0_6 = arith.constant 0 : index
    %c0_7 = arith.constant 0 : index
    %9 = vector.load %arg4[%c0_6, %c0_7] : memref<64x16xbf16, #tpu.memory_space<vmem>>, vector<64x16xbf16>
    %cst_8 = arith.constant dense<0.000000e+00> : vector<16x16xf32>
    %10 = tpu.matmul %8, %9, %cst_8 {dimension_numbers = #tpu.dot_dimension_numbers<[1], [0], [0], [1], [0, 0, 1, 1], [], []>} : vector<16x64xbf16>, vector<64x16xbf16>, vector<16x16xf32> -> vector<16x16xf32>
    %c0_9 = arith.constant 0 : index
    %c0_10 = arith.constant 0 : index
    %11 = vector.load %arg5[%c0_9, %c0_10] : memref<1x16xf32, #tpu.memory_space<vmem>>, vector<1x16xf32>
    %12 = vector.broadcast %11 : vector<1x16xf32> to vector<16x16xf32>
    %13 = arith.addf %10, %12 : vector<16x16xf32>
    %cst_11 = arith.constant dense<0xFF800000> : vector<16xf32>
    %14 = vector.multi_reduction <maximumf>, %13, %cst_11 [1] : vector<16x16xf32> to vector<16xf32>
    %15 = vector.shape_cast %14 : vector<16xf32> to vector<16x1xf32>
    %16 = vector.broadcast %15 : vector<16x1xf32> to vector<16x16xf32>
    %17 = arith.subf %13, %16 : vector<16x16xf32>
    %18 = math.exp %17 : vector<16x16xf32>
    %cst_12 = arith.constant dense<0.000000e+00> : vector<16xf32>
    %19 = vector.multi_reduction <add>, %18, %cst_12 [1] : vector<16x16xf32> to vector<16xf32>
    %20 = vector.shape_cast %19 : vector<16xf32> to vector<16x1xf32>
    %21 = math.log %20 : vector<16x1xf32>
    %22 = vector.broadcast %21 : vector<16x1xf32> to vector<16x16xf32>
    %23 = arith.subf %17, %22 : vector<16x16xf32>
    %c0_13 = arith.constant 0 : index
    %c0_14 = arith.constant 0 : index
    %24 = vector.load %arg6[%c0_13, %c0_14] : memref<16x16xf32, #tpu.memory_space<vmem>>, vector<16x16xf32>
    tpu.vector_store %arg6[%c0_13, %c0_14], %23 {strides = array<i32>} : memref<16x16xf32, #tpu.memory_space<vmem>>, vector<16x16xf32>,
    return
  }
  func.func @transform_0(%arg0: i32) -> (i32, i32) {
    %c0_i32 = arith.constant 0 : i32
    %c0_i32_0 = arith.constant 0 : i32
    return %arg0, %c0_i32 : i32, i32
  }
  func.func @transform_1(%arg0: i32) -> (i32, i32) {
    %c0_i32 = arith.constant 0 : i32
    %c0_i32_0 = arith.constant 0 : i32
    %c0_i32_1 = arith.constant 0 : i32
    return %c0_i32, %c0_i32_0 : i32, i32
  }
  func.func @transform_2(%arg0: i32) -> (i32, i32) {
    %c0_i32 = arith.constant 0 : i32
    %c0_i32_0 = arith.constant 0 : i32
    %c0_i32_1 = arith.constant 0 : i32
    return %c0_i32, %c0_i32_0 : i32, i32
  }
  func.func @transform_3(%arg0: i32) -> (i32, i32) {
    %c0_i32 = arith.constant 0 : i32
    %c0_i32_0 = arith.constant 0 : i32
    %c0_i32_1 = arith.constant 0 : i32
    return %c0_i32, %c0_i32_0 : i32, i32
  }
  func.func @transform_4(%arg0: i32) -> (i32, i32) {
    %c0_i32 = arith.constant 0 : i32
    %c0_i32_0 = arith.constant 0 : i32
    %c0_i32_1 = arith.constant 0 : i32
    return %c0_i32, %c0_i32_0 : i32, i32
  }
  func.func @transform_5(%arg0: i32) -> (i32, i32) {
    %c0_i32 = arith.constant 0 : i32
    %c0_i32_0 = arith.constant 0 : i32
    return %arg0, %c0_i32 : i32, i32
  }
}

module attributes {stable_mosaic.version = 11 : i64} {
  func.func @_conv_pool_relu_kernel(%arg0: i32, %arg1: memref<16x576xbf16, #tpu.memory_space<vmem>>, %arg2: memref<576x128xbf16, #tpu.memory_space<vmem>>, %arg3: memref<1x32xf32, #tpu.memory_space<vmem>>, %arg4: memref<16x32xbf16, #tpu.memory_space<vmem>>) attributes {dimension_semantics = [#tpu.dimension_semantics<parallel>], iteration_bounds = array<i64: 2>, scalar_prefetch = 0 : i64, scratch_operands = 0 : i64, tpu.core_type = #tpu.core_type<tc>, window_params = [{transform_indices = @transform_0, window_bounds = array<i64: 16, 576>}, {pipeline_mode = #tpu.pipeline_mode<synchronous>, transform_indices = @transform_1, window_bounds = array<i64: 576, 128>}, {pipeline_mode = #tpu.pipeline_mode<synchronous>, transform_indices = @transform_2, window_bounds = array<i64: 1, 32>}, {transform_indices = @transform_3, window_bounds = array<i64: 16, 32>}]} {
    %c0 = arith.constant 0 : index
    %c0_0 = arith.constant 0 : index
    %0 = vector.load %arg1[%c0, %c0_0] : memref<16x576xbf16, #tpu.memory_space<vmem>>, vector<16x576xbf16>
    %c0_1 = arith.constant 0 : index
    %c0_2 = arith.constant 0 : index
    %1 = vector.load %arg2[%c0_1, %c0_2] : memref<576x128xbf16, #tpu.memory_space<vmem>>, vector<576x128xbf16>
    %cst = arith.constant dense<0.000000e+00> : vector<16x128xf32>
    %2 = tpu.matmul %0, %1, %cst {dimension_numbers = #tpu.dot_dimension_numbers<[1], [0], [0], [1], [0, 0, 1, 1], [], []>} : vector<16x576xbf16>, vector<576x128xbf16>, vector<16x128xf32> -> vector<16x128xf32>
    %3 = vector.extract_strided_slice %2 {offsets = [0, 0], sizes = [16, 32], strides = [1, 1]} : vector<16x128xf32> to vector<16x32xf32>
    %4 = vector.extract_strided_slice %2 {offsets = [0, 32], sizes = [16, 32], strides = [1, 1]} : vector<16x128xf32> to vector<16x32xf32>
    %5 = arith.maximumf %3, %4 : vector<16x32xf32>
    %6 = vector.extract_strided_slice %2 {offsets = [0, 64], sizes = [16, 32], strides = [1, 1]} : vector<16x128xf32> to vector<16x32xf32>
    %7 = vector.extract_strided_slice %2 {offsets = [0, 96], sizes = [16, 32], strides = [1, 1]} : vector<16x128xf32> to vector<16x32xf32>
    %8 = arith.maximumf %6, %7 : vector<16x32xf32>
    %9 = arith.maximumf %5, %8 : vector<16x32xf32>
    %c0_3 = arith.constant 0 : index
    %c0_4 = arith.constant 0 : index
    %10 = vector.load %arg3[%c0_3, %c0_4] : memref<1x32xf32, #tpu.memory_space<vmem>>, vector<1x32xf32>
    %11 = vector.broadcast %10 : vector<1x32xf32> to vector<16x32xf32>
    %12 = arith.addf %9, %11 : vector<16x32xf32>
    %cst_5 = arith.constant 0.000000e+00 : f32
    %13 = vector.broadcast %cst_5 : f32 to vector<16x32xf32>
    %14 = arith.maximumf %12, %13 : vector<16x32xf32>
    %15 = arith.truncf %14 : vector<16x32xf32> to vector<16x32xbf16>
    %c0_6 = arith.constant 0 : index
    %c0_7 = arith.constant 0 : index
    %16 = vector.load %arg4[%c0_6, %c0_7] : memref<16x32xbf16, #tpu.memory_space<vmem>>, vector<16x32xbf16>
    tpu.vector_store %arg4[%c0_6, %c0_7], %15 {strides = array<i32>} : memref<16x32xbf16, #tpu.memory_space<vmem>>, vector<16x32xbf16>,
    return
  }
  func.func @transform_0(%arg0: i32) -> (i32, i32) {
    %c0_i32 = arith.constant 0 : i32
    %c0_i32_0 = arith.constant 0 : i32
    return %arg0, %c0_i32 : i32, i32
  }
  func.func @transform_1(%arg0: i32) -> (i32, i32) {
    %c0_i32 = arith.constant 0 : i32
    %c0_i32_0 = arith.constant 0 : i32
    %c0_i32_1 = arith.constant 0 : i32
    return %c0_i32, %c0_i32_0 : i32, i32
  }
  func.func @transform_2(%arg0: i32) -> (i32, i32) {
    %c0_i32 = arith.constant 0 : i32
    %c0_i32_0 = arith.constant 0 : i32
    %c0_i32_1 = arith.constant 0 : i32
    return %c0_i32, %c0_i32_0 : i32, i32
  }
  func.func @transform_3(%arg0: i32) -> (i32, i32) {
    %c0_i32 = arith.constant 0 : i32
    %c0_i32_0 = arith.constant 0 : i32
    return %arg0, %c0_i32 : i32, i32
  }
}

</mosaic_0001>

<llo_original>
// kernel: net_forward.3
$region0: #{net_forward.3}
  #allocation0 [shape = 'u32[]', space=smem, size = 0x4, offset = 0x4, fixed_abs, tag = 'smem constant byte address 0x4 - core index']
  #allocation1 [shape = 'u32[144,128]{1,0:T(1,128)}', space=vmem, size = 0x12000, scoped, tag = 'internal scratch']
  %s0 = inlined_call_operand.vmem [shape: bf16[288,36], index: 0, kind: input, shape index: {}]
  %s1 = inlined_call_operand.vmem [shape: bf16[36,64], index: 1, kind: input, shape index: {}]
  %s2 = inlined_call_operand.vmem [shape: f32[1,16], index: 2, kind: input, shape index: {}]
  %s3 = inlined_call_operand.vmem [shape: bf16[288,16], index: 3, kind: output, shape index: {}]
  %s4 = sld [smem:[#allocation0]]
  $region45: #{net_forward.3} parent=0
    _
  %s6 = ssub.s32 1, %s4
  %s7 = scalar_select 0, %s6, %s4
  loop: start=0, step=1, limit=4
  $region2: #{net_forward.3} parent=0 // loop_pre_header
    _
  $region3: #{net_forward.3} parent=0 // loop_header
    %s9 = sphi 0, %s13
    %p10 = scmp.ge.s32.totalorder %s9, 4
    %s19 = sphi 0, %s21
    %s22 = sphi 0, %s19
    %s23 = sphi 0, %s22
    %s39 = sphi 0, %s23
    %s43 = sphi 0, %s43
    %s45 = sphi 0, %s43
    %s46 = sphi 0, %s45
    %s60 = sphi 0, %s46
    %s64 = sphi 0, %s64
    %s66 = sphi 0, %s64
    %s67 = sphi 0, %s66
    %s81 = sphi 0, %s67
    %s87 = sphi 0, %s89
    %s90 = sphi 0, %s87
    %s91 = sphi 0, %s90
    %s107 = sphi 0, %s91
  $region4: #{net_forward.3} parent=0 // loop_header_branch
    %12 = sbr.rel (%p10) target = $region8
  $region5: #{net_forward.3} parent=0 // loop_body
    %s14 = ssub.s32 %s9, 1
    %s15 = ssub.s32 %s9, 2
    %s16 = sadd.s32 %s9, 1
    %s17 = ssub.s32 %s9, %s16
    %p18 = scmp.eq.s32.totalorder %s17, 0
    %s20 = sadd.s32 %s19, 1
    %s21 = scalar_select %p18, %s19, %s20
    %p24 = pneg %p18
    %p25 = scmp.eq.s32.totalorder %s9, 1
    %p26 = por %p24, %p25
    %p27 = scmp.ne.s32.totalorder %s19, %s22
    %p28 = scmp.eq.s32.totalorder %s9, 0
    %p29 = por %p27, %p28
    %p30 = scmp.ne.s32.totalorder %s19, %s22
    %p31 = scmp.eq.s32.totalorder %s14, 1
    %p32 = por %p30, %p31
    %p33 = scmp.ne.s32.totalorder %s22, %s23
    %p34 = scmp.eq.s32.totalorder %s14, 0
    %p35 = por %p33, %p34
    %p36 = scmp.ne.s32.totalorder %s22, %s23
    %p37 = scmp.eq.s32.totalorder %s15, 1
    %p38 = por %p36, %p37
    %p40 = scmp.ne.s32.totalorder %s23, %s39
    %p41 = scmp.eq.s32.totalorder %s15, 0
    %p42 = por %p40, %p41
    %s44 = sadd.s32 %s43, 1
    %p47 = scmp.eq.s32.totalorder %s9, 1
    %p48 = scmp.ne.s32.totalorder %s43, %s45
    %p49 = scmp.eq.s32.totalorder %s9, 0
    %p50 = por %p48, %p49
    %p51 = scmp.ne.s32.totalorder %s43, %s45
    %p52 = scmp.eq.s32.totalorder %s14, 1
    %p53 = por %p51, %p52
    %p54 = scmp.ne.s32.totalorder %s45, %s46
    %p55 = scmp.eq.s32.totalorder %s14, 0
    %p56 = por %p54, %p55
    %p57 = scmp.ne.s32.totalorder %s45, %s46
    %p58 = scmp.eq.s32.totalorder %s15, 1
    %p59 = por %p57, %p58
    %p61 = scmp.ne.s32.totalorder %s46, %s60
    %p62 = scmp.eq.s32.totalorder %s15, 0
    %p63 = por %p61, %p62
    %s65 = sadd.s32 %s64, 1
    %p68 = scmp.eq.s32.totalorder %s9, 1
    %p69 = scmp.ne.s32.totalorder %s64, %s66
    %p70 = scmp.eq.s32.totalorder %s9, 0
    %p71 = por %p69, %p70
    %p72 = scmp.ne.s32.totalorder %s64, %s66
    %p73 = scmp.eq.s32.totalorder %s14, 1
    %p74 = por %p72, %p73
    %p75 = scmp.ne.s32.totalorder %s66, %s67
    %p76 = scmp.eq.s32.totalorder %s14, 0
    %p77 = por %p75, %p76
    %p78 = scmp.ne.s32.totalorder %s66, %s67
    %p79 = scmp.eq.s32.totalorder %s15, 1
    %p80 = por %p78, %p79
    %p82 = scmp.ne.s32.totalorder %s67, %s81
    %p83 = scmp.eq.s32.totalorder %s15, 0
    %p84 = por %p82, %p83
    %s85 = ssub.s32 %s9, %s16
    %p86 = scmp.eq.s32.totalorder %s85, 0
    %s88 = sadd.s32 %s87, 1
    %s89 = scalar_select %p86, %s87, %s88
    %p92 = pneg %p86
    %p93 = scmp.eq.s32.totalorder %s9, 1
    %p94 = por %p92, %p93
    %p95 = scmp.ne.s32.totalorder %s87, %s90
    %p96 = scmp.eq.s32.totalorder %s9, 0
    %p97 = por %p95, %p96
    %p98 = scmp.ne.s32.totalorder %s87, %s90
    %p99 = scmp.eq.s32.totalorder %s14, 1
    %p100 = por %p98, %p99
    %p101 = scmp.ne.s32.totalorder %s90, %s91
    %p102 = scmp.eq.s32.totalorder %s14, 0
    %p103 = por %p101, %p102
    %p104 = scmp.ne.s32.totalorder %s90, %s91
    %p105 = scmp.eq.s32.totalorder %s15, 1
    %p106 = por %p104, %p105
    %p108 = scmp.ne.s32.totalorder %s91, %s107
    %p109 = scmp.eq.s32.totalorder %s15, 0
    %p110 = por %p108, %p109
    %p111 = scmp.le.s32.totalorder 1, %s9
    %p112 = scmp.lt.s32.totalorder %s9, 3
    %p113 = pnand %p111, %p112
    %p114 = pneg %p113
    // Predicated region
    $region9: #{net_forward.3} parent=5 // pred_check
      _
    $region10: #{net_forward.3} parent=5 // pred_check_branch
      %116 = sbr.rel (%p113) target = $region12
    $region11: #{net_forward.3} parent=5 // pred_region
      %s117 = ssub.s32 %s9, 1
      // Predicated region
      $region13: #{net_forward.3} parent=11 // pred_check
        %p118 = pneg %p56
      $region14: #{net_forward.3} parent=11 // pred_check_branch
        %120 = sbr.rel (%p118) target = $region16
      $region15: #{net_forward.3} parent=11 // pred_region
        _
      $region16: #{net_forward.3} parent=11 // pred_fallthru
        _
      // Predicated region
      $region17: #{net_forward.3} parent=11 // pred_check
        %p121 = pneg %p77
      $region18: #{net_forward.3} parent=11 // pred_check_branch
        %123 = sbr.rel (%p121) target = $region20
      $region19: #{net_forward.3} parent=11 // pred_region
        _
      $region20: #{net_forward.3} parent=11 // pred_fallthru
        _
    $region12: #{net_forward.3} parent=5 // pred_fallthru
      _
    %p124 = scmp.lt.s32.totalorder %s9, 2
    // Predicated region
    $region21: #{net_forward.3} parent=5 // pred_check
      %p125 = pneg %p124
    $region22: #{net_forward.3} parent=5 // pred_check_branch
      %127 = sbr.rel (%p125) target = $region24
    $region23: #{net_forward.3} parent=5 // pred_region
      // Predicated region
      $region25: #{net_forward.3} parent=23 // pred_check
        %p128 = pneg %p29
      $region26: #{net_forward.3} parent=23 // pred_check_branch
        %130 = sbr.rel (%p128) target = $region28
      $region27: #{net_forward.3} parent=23 // pred_region
        %s131 = smul.u32 18, %s9
        %p132 = scmp.lt.s32.totalorder %s131, 35
        %s133 = scalar_select %p132, %s131, 35
        %s134 = smul.addr %s133, 4
        %s135 = scalar_lea.vmem %s0, %s134
        %s136 = smul.u32 18, %s9
      $region28: #{net_forward.3} parent=23 // pred_fallthru
        _
    $region24: #{net_forward.3} parent=5 // pred_fallthru
      _
    %p137 = scmp.le.s32.totalorder 1, %s9
    %p138 = scmp.lt.s32.totalorder %s9, 3
    %p139 = pnand %p137, %p138
    %p140 = pneg %p139
    // Predicated region
    $region29: #{net_forward.3} parent=5 // pred_check
      _
    $region30: #{net_forward.3} parent=5 // pred_check_branch
      %142 = sbr.rel (%p139) target = $region32
    $region31: #{net_forward.3} parent=5 // pred_region
      %s143 = ssub.s32 %s9, 1
      %s144 = smul.u32 18, %s14
      %p145 = scmp.lt.s32.totalorder %s144, 35
      %s146 = scalar_select %p145, %s144, 35
      %s147 = smul.addr %s146, 4
      %s148 = scalar_lea.vmem %s0, %s147
      %p149 = pneg %p35
      %p150 = pneg %p32
      %p151 = pneg %p56
      %p152 = pneg %p53
      %p153 = pneg %p77
      %p154 = pneg %p74
      %p155 = pneg %p103
      %p156 = pneg %p100
      %s157 = smul.u32 18, %s14
      %p158 = scmp.lt.s32.totalorder %s157, 35
      %s159 = scalar_select %p158, %s157, 35
      %s160 = smul.addr %s159, 4
      %s161 = scalar_lea.vmem %s3, %s160
      %s162 = smul.u32 18, %s14
      %p163 = scmp.lt.s32.totalorder %s162, 35
      %s164 = scalar_select %p163, %s162, 35
      %s165 = smul.addr %s164, 4
      %s166 = scalar_lea.vmem %s0, %s165
      %s167 = smul.u32 18, %s14
      %s168 = smul.u32 18, %s14
      %p169 = scmp.lt.s32.totalorder %s168, 35
      %s170 = scalar_select %p169, %s168, 35
      %s171 = smul.addr %s170, 4
      %s172 = scalar_lea.vmem %s3, %s171
      %s173 = smul.u32 18, %s14
      %v175 = vld [vmem:[%s166] sm:$0xf]
      %v176 = vld [vmem:[%s166 + $0x4] sm:$0xf]
      %v177 = vld [vmem:[%s166 + $0x8] sm:$0xf]
      %v178 = vld [vmem:[%s166 + $0xc] sm:$0xf]
      %v179 = vld [vmem:[%s166 + $0x10] sm:$0xf]
      %v180 = vld [vmem:[%s166 + $0x14] sm:$0xf]
      %v181 = vld [vmem:[%s166 + $0x18] sm:$0xf]
      %v182 = vld [vmem:[%s166 + $0x1c] sm:$0xf]
      %v183 = vld [vmem:[%s166 + $0x20] sm:$0xf]
      %v184 = vld [vmem:[%s166 + $0x24] sm:$0xf]
      %v185 = vld [vmem:[%s166 + $0x28] sm:$0xf]
      %v186 = vld [vmem:[%s166 + $0x2c] sm:$0xf]
      %v187 = vld [vmem:[%s166 + $0x30] sm:$0xf]
      %v188 = vld [vmem:[%s166 + $0x34] sm:$0xf]
      %v189 = vld [vmem:[%s166 + $0x38] sm:$0xf]
      %v190 = vld [vmem:[%s166 + $0x3c] sm:$0xf]
      %v191 = vld [vmem:[%s166 + $0x40] sm:$0xf]
      %v192 = vld [vmem:[%s166 + $0x44] sm:$0xf]
      %v193 = vld [vmem:[%s1] sm:$0xf]
      %v194 = vld [vmem:[%s1 + $0x4] sm:$0xf]
      %v195 = vld [vmem:[%s1 + $0x8] sm:$0xf]
      %v196 = vld [vmem:[%s1 + $0xc] sm:$0xf]
      %v197 = vld [vmem:[%s1 + $0x10] sm:$0x3]
      %v216 = vunpack.c.l.b16 %v175
      %v217 = vunpack.c.l.b16 %v176
      %v218 = vunpack.c.l.b16 %v177
      %v219 = vunpack.c.l.b16 %v178
      %v220 = vunpack.c.l.b16 %v179
      %v221 = vunpack.c.l.b16 %v180
      %v222 = vunpack.c.l.b16 %v181
      %v223 = vunpack.c.l.b16 %v182
      %v224 = vunpack.c.l.b16 %v183
      %v225 = vunpack.c.l.b16 %v184
      %v226 = vunpack.c.l.b16 %v185
      %v227 = vunpack.c.l.b16 %v186
      %v228 = vunpack.c.l.b16 %v187
      %v229 = vunpack.c.l.b16 %v188
      %v230 = vunpack.c.l.b16 %v189
      %v231 = vunpack.c.l.b16 %v190
      %v232 = vunpack.c.l.b16 %v191
      %v233 = vunpack.c.l.b16 %v192
      %v234 = vpack.c.b16 %v217, %v216
      %v235 = vpack.c.b16 %v219, %v218
      %v236 = vpack.c.b16 %v221, %v220
      %v237 = vpack.c.b16 %v223, %v222
      %v238 = vpack.c.b16 %v225, %v224
      %v239 = vpack.c.b16 %v227, %v226
      %v240 = vpack.c.b16 %v229, %v228
      %v241 = vpack.c.b16 %v231, %v230
      %v242 = vpack.c.b16 %v233, %v232
      %v248 = vunpack.c.l.b16 %v193
      %v249 = vunpack.c.l.b16 %v194
      %v250 = vunpack.c.l.b16 %v195
      %v251 = vunpack.c.l.b16 %v196
      %v252 = vunpack.c.l.b16 %v197
      %v253 = vpack.c.b16 %v249, %v248
      %v254 = vpack.c.b16 %v251, %v250
      %v255 = vpack.c.b16 %v252, %v252
      %vm258 = vcmask 293888
      %v260 = vsel %vm258, %v234, 0
      %v263 = vsel %vm258, %v235, 0
      %v266 = vsel %vm258, %v236, 0
      %v269 = vsel %vm258, %v237, 0
      %v272 = vsel %vm258, %v238, 0
      %v275 = vsel %vm258, %v239, 0
      %v278 = vsel %vm258, %v240, 0
      %v281 = vsel %vm258, %v241, 0
      %v284 = vsel %vm258, %v242, 0
      %vm286 = vcmask 1041408
      %v288 = vsel %vm286, %v255, 0
      %290 = vmatprep.subr.bf16.mxu0 0
      %291 = vmatpush1.bf16.msra.mxu0 0
      %292 = vmatprep.subr.bf16.mxu0 0
      %293 = vmatpush1.bf16.msra.mxu0 0
      %294 = vmatprep.subr.bf16.mxu0 0
      %295 = vmatpush1.bf16.msra.mxu0 0
      %296 = vmatprep.subr.bf16.mxu0 0
      %297 = vmatpush1.bf16.msra.mxu0 0
      %298 = vmatprep.subr.bf16.mxu0 0
      %299 = vmatpush1.bf16.msra.mxu0 0
      %300 = vmatprep.subr.bf16.mxu0 0
      %301 = vmatpush1.bf16.msra.mxu0 %v288
      %302 = vmatprep.subr.bf16.mxu0 0
      %303 = vmatpush1.bf16.msra.mxu0 %v254
      %304 = vmatprep.subr.bf16.mxu0 0
      %305 = vmatpush1.bf16.msra.mxu0 %v253
      %306 = vmatprep.subr.bf16.mxu0 0
      %307 = vmatpush2.bf16.msra.mxu0 0
      %308 = vmatprep.subr.bf16.mxu0 0
      %309 = vmatpush2.bf16.msra.mxu0 0
      %310 = vmatprep.subr.bf16.mxu0 0
      %311 = vmatpush2.bf16.msra.mxu0 0
      %312 = vmatprep.subr.bf16.mxu0 0
      %313 = vmatpush2.bf16.msra.mxu0 0
      %314 = vmatprep.subr.bf16.mxu0 0
      %315 = vmatpush2.bf16.msra.mxu0 0
      %316 = vmatprep.subr.bf16.mxu0 0
      %317 = vmatpush2.bf16.msra.mxu0 0
      %318 = vmatprep.subr.bf16.mxu0 0
      %319 = vmatpush2.bf16.msra.mxu0 0
      %320 = vmatprep.subr.bf16.mxu0 0
      %321 = vmatpush2.bf16.msra.mxu0 0
      %322 = vmatprep.mubr.bf16.mxu0 0
      %323 = vmatmul.mubr.bf16.gmra.mxu0 %v260
      %v324 = vpop.f32.mrf.mxu0
      %v325 = vadd.f32 0.0, %v324
      %v326 = vpop.f32.mrf.mxu0
      %v327 = vpop.f32.mrf.mxu0
      %v328 = vadd.f32 0.0, %v327
      %v329 = vpop.f32.mrf.mxu0
      %330 = vmatprep.mubr.bf16.mxu0 0
      %331 = vmatmul.mubr.bf16.gmra.mxu0 %v263
      %v332 = vpop.f32.mrf.mxu0
      %v333 = vadd.f32 0.0, %v332
      %v334 = vpop.f32.mrf.mxu0
      %v335 = vpop.f32.mrf.mxu0
      %v336 = vadd.f32 0.0, %v335
      %v337 = vpop.f32.mrf.mxu0
      %338 = vmatprep.mubr.bf16.mxu0 0
      %339 = vmatmul.mubr.bf16.gmra.mxu0 %v266
      %v340 = vpop.f32.mrf.mxu0
      %v341 = vadd.f32 0.0, %v340
      %v342 = vpop.f32.mrf.mxu0
      %v343 = vpop.f32.mrf.mxu0
      %v344 = vadd.f32 0.0, %v343
      %v345 = vpop.f32.mrf.mxu0
      %346 = vmatprep.mubr.bf16.mxu0 0
      %347 = vmatmul.mubr.bf16.gmra.mxu0 %v269
      %v348 = vpop.f32.mrf.mxu0
      %v349 = vadd.f32 0.0, %v348
      %v350 = vpop.f32.mrf.mxu0
      %v351 = vpop.f32.mrf.mxu0
      %v352 = vadd.f32 0.0, %v351
      %v353 = vpop.f32.mrf.mxu0
      %354 = vmatprep.mubr.bf16.mxu0 0
      %355 = vmatmul.mubr.bf16.gmra.mxu0 %v272
      %v356 = vpop.f32.mrf.mxu0
      %v357 = vadd.f32 0.0, %v356
      %v358 = vpop.f32.mrf.mxu0
      %v359 = vpop.f32.mrf.mxu0
      %v360 = vadd.f32 0.0, %v359
      %v361 = vpop.f32.mrf.mxu0
      %362 = vmatprep.mubr.bf16.mxu0 0
      %363 = vmatmul.mubr.bf16.gmra.mxu0 %v275
      %v364 = vpop.f32.mrf.mxu0
      %v365 = vadd.f32 0.0, %v364
      %v366 = vpop.f32.mrf.mxu0
      %v367 = vpop.f32.mrf.mxu0
      %v368 = vadd.f32 0.0, %v367
      %v369 = vpop.f32.mrf.mxu0
      %370 = vmatprep.mubr.bf16.mxu0 0
      %371 = vmatmul.mubr.bf16.gmra.mxu0 %v278
      %v372 = vpop.f32.mrf.mxu0
      %v373 = vadd.f32 0.0, %v372
      %v374 = vpop.f32.mrf.mxu0
      %v375 = vpop.f32.mrf.mxu0
      %v376 = vadd.f32 0.0, %v375
      %v377 = vpop.f32.mrf.mxu0
      %378 = vmatprep.mubr.bf16.mxu0 0
      %379 = vmatmul.mubr.bf16.gmra.mxu0 %v281
      %v380 = vpop.f32.mrf.mxu0
      %v381 = vadd.f32 0.0, %v380
      %v382 = vpop.f32.mrf.mxu0
      %v383 = vpop.f32.mrf.mxu0
      %v384 = vadd.f32 0.0, %v383
      %v385 = vpop.f32.mrf.mxu0
      %386 = vmatprep.mubr.bf16.mxu0 0
      %387 = vmatmul.mubr.bf16.gmra.mxu0 %v284
      %v388 = vpop.f32.mrf.mxu0
      %v389 = vadd.f32 0.0, %v388
      %v390 = vpop.f32.mrf.mxu0
      %v391 = vpop.f32.mrf.mxu0
      %v392 = vadd.f32 0.0, %v391
      %v393 = vpop.f32.mrf.mxu0
      %394 = vdwg.mxu0
      %413 = vrot.lane.b32.xlu0 %v325, 112
      %v414 = vpop.permute.xlu0 %413
      %415 = vrot.lane.b32.xlu0 %v328, 112
      %v416 = vpop.permute.xlu0 %415
      %417 = vrot.lane.b32.xlu0 %v333, 112
      %v418 = vpop.permute.xlu0 %417
      %419 = vrot.lane.b32.xlu0 %v336, 112
      %v420 = vpop.permute.xlu0 %419
      %421 = vrot.lane.b32.xlu0 %v341, 112
      %v422 = vpop.permute.xlu0 %421
      %423 = vrot.lane.b32.xlu0 %v344, 112
      %v424 = vpop.permute.xlu0 %423
      %425 = vrot.lane.b32.xlu0 %v349, 112
      %v426 = vpop.permute.xlu0 %425
      %427 = vrot.lane.b32.xlu0 %v352, 112
      %v428 = vpop.permute.xlu0 %427
      %429 = vrot.lane.b32.xlu0 %v357, 112
      %v430 = vpop.permute.xlu0 %429
      %431 = vrot.lane.b32.xlu0 %v360, 112
      %v432 = vpop.permute.xlu0 %431
      %433 = vrot.lane.b32.xlu0 %v365, 112
      %v434 = vpop.permute.xlu0 %433
      %435 = vrot.lane.b32.xlu0 %v368, 112
      %v436 = vpop.permute.xlu0 %435
      %437 = vrot.lane.b32.xlu0 %v373, 112
      %v438 = vpop.permute.xlu0 %437
      %439 = vrot.lane.b32.xlu0 %v376, 112
      %v440 = vpop.permute.xlu0 %439
      %441 = vrot.lane.b32.xlu0 %v381, 112
      %v442 = vpop.permute.xlu0 %441
      %443 = vrot.lane.b32.xlu0 %v384, 112
      %v444 = vpop.permute.xlu0 %443
      %445 = vrot.lane.b32.xlu0 %v389, 112
      %v446 = vpop.permute.xlu0 %445
      %447 = vrot.lane.b32.xlu0 %v392, 112
      %v448 = vpop.permute.xlu0 %447
      %v467 = vmax.f32 %v325, %v414
      %v468 = vmax.f32 %v328, %v416
      %v469 = vmax.f32 %v333, %v418
      %v470 = vmax.f32 %v336, %v420
      %v471 = vmax.f32 %v341, %v422
      %v472 = vmax.f32 %v344, %v424
      %v473 = vmax.f32 %v349, %v426
      %v474 = vmax.f32 %v352, %v428
      %v475 = vmax.f32 %v357, %v430
      %v476 = vmax.f32 %v360, %v432
      %v477 = vmax.f32 %v365, %v434
      %v478 = vmax.f32 %v368, %v436
      %v479 = vmax.f32 %v373, %v438
      %v480 = vmax.f32 %v376, %v440
      %v481 = vmax.f32 %v381, %v442
      %v482 = vmax.f32 %v384, %v444
      %v483 = vmax.f32 %v389, %v446
      %v484 = vmax.f32 %v392, %v448
      %503 = vrot.lane.b32.xlu0 %v467, 96
      %v504 = vpop.permute.xlu0 %503
      %505 = vrot.lane.b32.xlu0 %v468, 96
      %v506 = vpop.permute.xlu0 %505
      %507 = vrot.lane.b32.xlu0 %v469, 96
      %v508 = vpop.permute.xlu0 %507
      %509 = vrot.lane.b32.xlu0 %v470, 96
      %v510 = vpop.permute.xlu0 %509
      %511 = vrot.lane.b32.xlu0 %v471, 96
      %v512 = vpop.permute.xlu0 %511
      %513 = vrot.lane.b32.xlu0 %v472, 96
      %v514 = vpop.permute.xlu0 %513
      %515 = vrot.lane.b32.xlu0 %v473, 96
      %v516 = vpop.permute.xlu0 %515
      %517 = vrot.lane.b32.xlu0 %v474, 96
      %v518 = vpop.permute.xlu0 %517
      %519 = vrot.lane.b32.xlu0 %v475, 96
      %v520 = vpop.permute.xlu0 %519
      %521 = vrot.lane.b32.xlu0 %v476, 96
      %v522 = vpop.permute.xlu0 %521
      %523 = vrot.lane.b32.xlu0 %v477, 96
      %v524 = vpop.permute.xlu0 %523
      %525 = vrot.lane.b32.xlu0 %v478, 96
      %v526 = vpop.permute.xlu0 %525
      %527 = vrot.lane.b32.xlu0 %v479, 96
      %v528 = vpop.permute.xlu0 %527
      %529 = vrot.lane.b32.xlu0 %v480, 96
      %v530 = vpop.permute.xlu0 %529
      %531 = vrot.lane.b32.xlu0 %v481, 96
      %v532 = vpop.permute.xlu0 %531
      %533 = vrot.lane.b32.xlu0 %v482, 96
      %v534 = vpop.permute.xlu0 %533
      %535 = vrot.lane.b32.xlu0 %v483, 96
      %v536 = vpop.permute.xlu0 %535
      %537 = vrot.lane.b32.xlu0 %v484, 96
      %v538 = vpop.permute.xlu0 %537
      %v557 = vmax.f32 %v467, %v504
      %v558 = vmax.f32 %v468, %v506
      %v559 = vmax.f32 %v469, %v508
      %v560 = vmax.f32 %v470, %v510
      %v561 = vmax.f32 %v471, %v512
      %v562 = vmax.f32 %v472, %v514
      %v563 = vmax.f32 %v473, %v516
      %v564 = vmax.f32 %v474, %v518
      %v565 = vmax.f32 %v475, %v520
      %v566 = vmax.f32 %v476, %v522
      %v567 = vmax.f32 %v477, %v524
      %v568 = vmax.f32 %v478, %v526
      %v569 = vmax.f32 %v479, %v528
      %v570 = vmax.f32 %v480, %v530
      %v571 = vmax.f32 %v481, %v532
      %v572 = vmax.f32 %v482, %v534
      %v573 = vmax.f32 %v483, %v536
      %v574 = vmax.f32 %v484, %v538
      %v575 = vld [vmem:[%s2] sm:$0x1]
      %v577 = vlaneseq
      %v578 = vshrl.u32 %v577, 7
      %v579 = vsub.s32 0, %v578
      %v580 = vrot.slane %v575, %v579
      %v582 = vadd.f32 %v557, %v580
      %v583 = vadd.f32 %v558, %v580
      %v584 = vadd.f32 %v559, %v580
      %v585 = vadd.f32 %v560, %v580
      %v586 = vadd.f32 %v561, %v580
      %v587 = vadd.f32 %v562, %v580
      %v588 = vadd.f32 %v563, %v580
      %v589 = vadd.f32 %v564, %v580
      %v590 = vadd.f32 %v565, %v580
      %v591 = vadd.f32 %v566, %v580
      %v592 = vadd.f32 %v567, %v580
      %v593 = vadd.f32 %v568, %v580
      %v594 = vadd.f32 %v569, %v580
      %v595 = vadd.f32 %v570, %v580
      %v596 = vadd.f32 %v571, %v580
      %v597 = vadd.f32 %v572, %v580
      %v598 = vadd.f32 %v573, %v580
      %v599 = vadd.f32 %v574, %v580
      %v600 = vmax.f32 %v582, 0.0
      %v601 = vmax.f32 %v583, 0.0
      %v602 = vmax.f32 %v584, 0.0
      %v603 = vmax.f32 %v585, 0.0
      %v604 = vmax.f32 %v586, 0.0
      %v605 = vmax.f32 %v587, 0.0
      %v606 = vmax.f32 %v588, 0.0
      %v607 = vmax.f32 %v589, 0.0
      %v608 = vmax.f32 %v590, 0.0
      %v609 = vmax.f32 %v591, 0.0
      %v610 = vmax.f32 %v592, 0.0
      %v611 = vmax.f32 %v593, 0.0
      %v612 = vmax.f32 %v594, 0.0
      %v613 = vmax.f32 %v595, 0.0
      %v614 = vmax.f32 %v596, 0.0
      %v615 = vmax.f32 %v597, 0.0
      %v616 = vmax.f32 %v598, 0.0
      %v617 = vmax.f32 %v599, 0.0
      %v618 = vpack.c.bf16 %v601, %v600
      %v619 = vpack.c.bf16 %v603, %v602
      %v620 = vpack.c.bf16 %v605, %v604
      %v621 = vpack.c.bf16 %v607, %v606
      %v622 = vpack.c.bf16 %v609, %v608
      %v623 = vpack.c.bf16 %v611, %v610
      %v624 = vpack.c.bf16 %v613, %v612
      %v625 = vpack.c.bf16 %v615, %v614
      %v626 = vpack.c.bf16 %v617, %v616
      %v636 = vunpack.c.l.b16 %v618
      %v637 = vunpack.c.h.b16 %v618
      %v638 = vunpack.c.l.b16 %v619
      %v639 = vunpack.c.h.b16 %v619
      %v640 = vunpack.c.l.b16 %v620
      %v641 = vunpack.c.h.b16 %v620
      %v642 = vunpack.c.l.b16 %v621
      %v643 = vunpack.c.h.b16 %v621
      %v644 = vunpack.c.l.b16 %v622
      %v645 = vunpack.c.h.b16 %v622
      %v646 = vunpack.c.l.b16 %v623
      %v647 = vunpack.c.h.b16 %v623
      %v648 = vunpack.c.l.b16 %v624
      %v649 = vunpack.c.h.b16 %v624
      %v650 = vunpack.c.l.b16 %v625
      %v651 = vunpack.c.h.b16 %v625
      %v652 = vunpack.c.l.b16 %v626
      %v653 = vunpack.c.h.b16 %v626
      %v654 = vpack.c.b16 %v636, %v636
      %v655 = vpack.c.b16 %v637, %v637
      %v656 = vpack.c.b16 %v638, %v638
      %v657 = vpack.c.b16 %v639, %v639
      %v658 = vpack.c.b16 %v640, %v640
      %v659 = vpack.c.b16 %v641, %v641
      %v660 = vpack.c.b16 %v642, %v642
      %v661 = vpack.c.b16 %v643, %v643
      %v662 = vpack.c.b16 %v644, %v644
      %v663 = vpack.c.b16 %v645, %v645
      %v664 = vpack.c.b16 %v646, %v646
      %v665 = vpack.c.b16 %v647, %v647
      %v666 = vpack.c.b16 %v648, %v648
      %v667 = vpack.c.b16 %v649, %v649
      %v668 = vpack.c.b16 %v650, %v650
      %v669 = vpack.c.b16 %v651, %v651
      %v670 = vpack.c.b16 %v652, %v652
      %v671 = vpack.c.b16 %v653, %v653
      %vm690 = vcmask 125952
      %691 = vst.msk [vmem:[%s172] sm:$0xf] %vm690, %v654
      %692 = vst.msk [vmem:[%s172 + $0x4] sm:$0xf] %vm690, %v655
      %693 = vst.msk [vmem:[%s172 + $0x8] sm:$0xf] %vm690, %v656
      %694 = vst.msk [vmem:[%s172 + $0xc] sm:$0xf] %vm690, %v657
      %695 = vst.msk [vmem:[%s172 + $0x10] sm:$0xf] %vm690, %v658
      %696 = vst.msk [vmem:[%s172 + $0x14] sm:$0xf] %vm690, %v659
      %697 = vst.msk [vmem:[%s172 + $0x18] sm:$0xf] %vm690, %v660
      %698 = vst.msk [vmem:[%s172 + $0x1c] sm:$0xf] %vm690, %v661
      %699 = vst.msk [vmem:[%s172 + $0x20] sm:$0xf] %vm690, %v662
      %700 = vst.msk [vmem:[%s172 + $0x24] sm:$0xf] %vm690, %v663
      %701 = vst.msk [vmem:[%s172 + $0x28] sm:$0xf] %vm690, %v664
      %702 = vst.msk [vmem:[%s172 + $0x2c] sm:$0xf] %vm690, %v665
      %703 = vst.msk [vmem:[%s172 + $0x30] sm:$0xf] %vm690, %v666
      %704 = vst.msk [vmem:[%s172 + $0x34] sm:$0xf] %vm690, %v667
      %705 = vst.msk [vmem:[%s172 + $0x38] sm:$0xf] %vm690, %v668
      %706 = vst.msk [vmem:[%s172 + $0x3c] sm:$0xf] %vm690, %v669
      %707 = vst.msk [vmem:[%s172 + $0x40] sm:$0xf] %vm690, %v670
      %708 = vst.msk [vmem:[%s172 + $0x44] sm:$0xf] %vm690, %v671
      %s709 = smul.u32 18, %s14
      %p710 = scmp.lt.s32.totalorder %s709, 35
      %s711 = scalar_select %p710, %s709, 35
      %s712 = smul.addr %s711, 4
      %s713 = scalar_lea.vmem %s3, %s712
      // Predicated region
      $region33: #{net_forward.3} parent=31 // pred_check
        %p714 = pneg %p100
      $region34: #{net_forward.3} parent=31 // pred_check_branch
        %716 = sbr.rel (%p714) target = $region36
      $region35: #{net_forward.3} parent=31 // pred_region
        %s717 = smul.u32 18, %s14
      $region36: #{net_forward.3} parent=31 // pred_fallthru
        _
    $region32: #{net_forward.3} parent=5 // pred_fallthru
      _
    %p718 = scmp.le.s32.totalorder 2, %s9
    // Predicated region
    $region37: #{net_forward.3} parent=5 // pred_check
      %p719 = pneg %p718
    $region38: #{net_forward.3} parent=5 // pred_check_branch
      %721 = sbr.rel (%p719) target = $region40
    $region39: #{net_forward.3} parent=5 // pred_region
      %s722 = ssub.s32 %s9, 2
      // Predicated region
      $region41: #{net_forward.3} parent=39 // pred_check
        %p723 = pneg %p106
      $region42: #{net_forward.3} parent=39 // pred_check_branch
        %725 = sbr.rel (%p723) target = $region44
      $region43: #{net_forward.3} parent=39 // pred_region
        %s726 = smul.u32 18, %s15
        %p727 = scmp.lt.s32.totalorder %s726, 35
        %s728 = scalar_select %p727, %s726, 35
        %s729 = smul.addr %s728, 4
        %s730 = scalar_lea.vmem %s3, %s729
      $region44: #{net_forward.3} parent=39 // pred_fallthru
        _
    $region40: #{net_forward.3} parent=5 // pred_fallthru
      _
  $region6: #{net_forward.3} parent=0 // loop_footer
    %s13 = sadd.s32 1, %s9
  $region7: #{net_forward.3} parent=0 // loop_footer_branch
    %8 = sbr.rel target = $region3
  $region8: #{net_forward.3} parent=0 // loop_exit
    _

// kernel: net_forward.5
$region0: #{net_forward.5}
  #allocation0 [shape = 'u32[]', space=smem, size = 0x4, offset = 0x4, fixed_abs, tag = 'smem constant byte address 0x4 - core index']
  #allocation1 [shape = 'u32[144,128]{1,0:T(1,128)}', space=vmem, size = 0x12000, scoped, tag = 'internal scratch']
  %s0 = inlined_call_operand.vmem [shape: bf16[16,512], index: 0, kind: input, shape index: {}]
  %s1 = inlined_call_operand.vmem [shape: bf16[512,64], index: 1, kind: input, shape index: {}]
  %s2 = inlined_call_operand.vmem [shape: f32[1,64], index: 2, kind: input, shape index: {}]
  %s3 = inlined_call_operand.vmem [shape: bf16[64,16], index: 3, kind: input, shape index: {}]
  %s4 = inlined_call_operand.vmem [shape: f32[1,16], index: 4, kind: input, shape index: {}]
  %s5 = inlined_call_operand.vmem [shape: f32[16,16], index: 5, kind: output, shape index: {}]
  %s6 = sld [smem:[#allocation0]]
  $region30: #{net_forward.5} parent=0
    _
  %s8 = ssub.s32 1, %s6
  %s9 = scalar_select 0, %s8, %s6
  // Predicated region
  $region2: #{net_forward.5} parent=0 // pred_check
    _
  $region3: #{net_forward.5} parent=0 // pred_check_branch
    %11 = sbr.rel (0) target = $region5
  $region4: #{net_forward.5} parent=0 // pred_region
    _
  $region5: #{net_forward.5} parent=0 // pred_fallthru
    _
  // Predicated region
  $region6: #{net_forward.5} parent=0 // pred_check
    _
  $region7: #{net_forward.5} parent=0 // pred_check_branch
    %13 = sbr.rel (0) target = $region9
  $region8: #{net_forward.5} parent=0 // pred_region
    _
  $region9: #{net_forward.5} parent=0 // pred_fallthru
    _
  // Predicated region
  $region10: #{net_forward.5} parent=0 // pred_check
    _
  $region11: #{net_forward.5} parent=0 // pred_check_branch
    %15 = sbr.rel (0) target = $region13
  $region12: #{net_forward.5} parent=0 // pred_region
    _
  $region13: #{net_forward.5} parent=0 // pred_fallthru
    _
  // Predicated region
  $region14: #{net_forward.5} parent=0 // pred_check
    _
  $region15: #{net_forward.5} parent=0 // pred_check_branch
    %17 = sbr.rel (0) target = $region17
  $region16: #{net_forward.5} parent=0 // pred_region
    _
  $region17: #{net_forward.5} parent=0 // pred_fallthru
    _
  // Predicated region
  $region18: #{net_forward.5} parent=0 // pred_check
    _
  $region19: #{net_forward.5} parent=0 // pred_check_branch
    %19 = sbr.rel (0) target = $region21
  $region20: #{net_forward.5} parent=0 // pred_region
    _
  $region21: #{net_forward.5} parent=0 // pred_fallthru
    _
  %v21 = vld [vmem:[%s0] sm:$0xff]
  %v22 = vld [vmem:[%s0 + $0x8] sm:$0xff]
  %v23 = vld [vmem:[%s0 + $0x10] sm:$0xff]
  %v24 = vld [vmem:[%s0 + $0x18] sm:$0xff]
  %v25 = vld [vmem:[%s1] sm:$0xf]
  %v26 = vld [vmem:[%s1 + $0x4] sm:$0xf]
  %v27 = vld [vmem:[%s1 + $0x8] sm:$0xf]
  %v28 = vld [vmem:[%s1 + $0xc] sm:$0xf]
  %v29 = vld [vmem:[%s1 + $0x10] sm:$0xf]
  %v30 = vld [vmem:[%s1 + $0x14] sm:$0xf]
  %v31 = vld [vmem:[%s1 + $0x18] sm:$0xf]
  %v32 = vld [vmem:[%s1 + $0x1c] sm:$0xf]
  %v33 = vld [vmem:[%s1 + $0x20] sm:$0xf]
  %v34 = vld [vmem:[%s1 + $0x24] sm:$0xf]
  %v35 = vld [vmem:[%s1 + $0x28] sm:$0xf]
  %v36 = vld [vmem:[%s1 + $0x2c] sm:$0xf]
  %v37 = vld [vmem:[%s1 + $0x30] sm:$0xf]
  %v38 = vld [vmem:[%s1 + $0x34] sm:$0xf]
  %v39 = vld [vmem:[%s1 + $0x38] sm:$0xf]
  %v40 = vld [vmem:[%s1 + $0x3c] sm:$0xf]
  %v41 = vld [vmem:[%s1 + $0x40] sm:$0xf]
  %v42 = vld [vmem:[%s1 + $0x44] sm:$0xf]
  %v43 = vld [vmem:[%s1 + $0x48] sm:$0xf]
  %v44 = vld [vmem:[%s1 + $0x4c] sm:$0xf]
  %v45 = vld [vmem:[%s1 + $0x50] sm:$0xf]
  %v46 = vld [vmem:[%s1 + $0x54] sm:$0xf]
  %v47 = vld [vmem:[%s1 + $0x58] sm:$0xf]
  %v48 = vld [vmem:[%s1 + $0x5c] sm:$0xf]
  %v49 = vld [vmem:[%s1 + $0x60] sm:$0xf]
  %v50 = vld [vmem:[%s1 + $0x64] sm:$0xf]
  %v51 = vld [vmem:[%s1 + $0x68] sm:$0xf]
  %v52 = vld [vmem:[%s1 + $0x6c] sm:$0xf]
  %v53 = vld [vmem:[%s1 + $0x70] sm:$0xf]
  %v54 = vld [vmem:[%s1 + $0x74] sm:$0xf]
  %v55 = vld [vmem:[%s1 + $0x78] sm:$0xf]
  %v56 = vld [vmem:[%s1 + $0x7c] sm:$0xf]
  %v57 = vld [vmem:[%s1 + $0x80] sm:$0xf]
  %v58 = vld [vmem:[%s1 + $0x84] sm:$0xf]
  %v59 = vld [vmem:[%s1 + $0x88] sm:$0xf]
  %v60 = vld [vmem:[%s1 + $0x8c] sm:$0xf]
  %v61 = vld [vmem:[%s1 + $0x90] sm:$0xf]
  %v62 = vld [vmem:[%s1 + $0x94] sm:$0xf]
  %v63 = vld [vmem:[%s1 + $0x98] sm:$0xf]
  %v64 = vld [vmem:[%s1 + $0x9c] sm:$0xf]
  %v65 = vld [vmem:[%s1 + $0xa0] sm:$0xf]
  %v66 = vld [vmem:[%s1 + $0xa4] sm:$0xf]
  %v67 = vld [vmem:[%s1 + $0xa8] sm:$0xf]
  %v68 = vld [vmem:[%s1 + $0xac] sm:$0xf]
  %v69 = vld [vmem:[%s1 + $0xb0] sm:$0xf]
  %v70 = vld [vmem:[%s1 + $0xb4] sm:$0xf]
  %v71 = vld [vmem:[%s1 + $0xb8] sm:$0xf]
  %v72 = vld [vmem:[%s1 + $0xbc] sm:$0xf]
  %v73 = vld [vmem:[%s1 + $0xc0] sm:$0xf]
  %v74 = vld [vmem:[%s1 + $0xc4] sm:$0xf]
  %v75 = vld [vmem:[%s1 + $0xc8] sm:$0xf]
  %v76 = vld [vmem:[%s1 + $0xcc] sm:$0xf]
  %v77 = vld [vmem:[%s1 + $0xd0] sm:$0xf]
  %v78 = vld [vmem:[%s1 + $0xd4] sm:$0xf]
  %v79 = vld [vmem:[%s1 + $0xd8] sm:$0xf]
  %v80 = vld [vmem:[%s1 + $0xdc] sm:$0xf]
  %v81 = vld [vmem:[%s1 + $0xe0] sm:$0xf]
  %v82 = vld [vmem:[%s1 + $0xe4] sm:$0xf]
  %v83 = vld [vmem:[%s1 + $0xe8] sm:$0xf]
  %v84 = vld [vmem:[%s1 + $0xec] sm:$0xf]
  %v85 = vld [vmem:[%s1 + $0xf0] sm:$0xf]
  %v86 = vld [vmem:[%s1 + $0xf4] sm:$0xf]
  %v87 = vld [vmem:[%s1 + $0xf8] sm:$0xf]
  %v88 = vld [vmem:[%s1 + $0xfc] sm:$0xf]
  %v89 = vld [vmem:[%s2] sm:$0x1]
  %v91 = vlaneseq
  %v92 = vshrl.u32 %v91, 7
  %v93 = vsub.s32 0, %v92
  %v94 = vrot.slane %v89, %v93
  %v100 = vunpack.c.l.b16 %v21
  %v101 = vunpack.c.h.b16 %v21
  %v102 = vunpack.c.l.b16 %v22
  %v103 = vunpack.c.h.b16 %v22
  %v104 = vunpack.c.l.b16 %v23
  %v105 = vunpack.c.h.b16 %v23
  %v106 = vunpack.c.l.b16 %v24
  %v107 = vunpack.c.h.b16 %v24
  %v108 = vpack.c.b16 %v104, %v100
  %v109 = vpack.c.b16 %v105, %v101
  %v110 = vpack.c.b16 %v106, %v102
  %v111 = vpack.c.b16 %v107, %v103
  %v180 = vunpack.c.l.b16 %v25
  %v181 = vunpack.c.l.b16 %v26
  %v182 = vunpack.c.l.b16 %v27
  %v183 = vunpack.c.l.b16 %v28
  %v184 = vunpack.c.l.b16 %v29
  %v185 = vunpack.c.l.b16 %v30
  %v186 = vunpack.c.l.b16 %v31
  %v187 = vunpack.c.l.b16 %v32
  %v188 = vunpack.c.l.b16 %v33
  %v189 = vunpack.c.l.b16 %v34
  %v190 = vunpack.c.l.b16 %v35
  %v191 = vunpack.c.l.b16 %v36
  %v192 = vunpack.c.l.b16 %v37
  %v193 = vunpack.c.l.b16 %v38
  %v194 = vunpack.c.l.b16 %v39
  %v195 = vunpack.c.l.b16 %v40
  %v196 = vunpack.c.l.b16 %v41
  %v197 = vunpack.c.l.b16 %v42
  %v198 = vunpack.c.l.b16 %v43
  %v199 = vunpack.c.l.b16 %v44
  %v200 = vunpack.c.l.b16 %v45
  %v201 = vunpack.c.l.b16 %v46
  %v202 = vunpack.c.l.b16 %v47
  %v203 = vunpack.c.l.b16 %v48
  %v204 = vunpack.c.l.b16 %v49
  %v205 = vunpack.c.l.b16 %v50
  %v206 = vunpack.c.l.b16 %v51
  %v207 = vunpack.c.l.b16 %v52
  %v208 = vunpack.c.l.b16 %v53
  %v209 = vunpack.c.l.b16 %v54
  %v210 = vunpack.c.l.b16 %v55
  %v211 = vunpack.c.l.b16 %v56
  %v212 = vunpack.c.l.b16 %v57
  %v213 = vunpack.c.l.b16 %v58
  %v214 = vunpack.c.l.b16 %v59
  %v215 = vunpack.c.l.b16 %v60
  %v216 = vunpack.c.l.b16 %v61
  %v217 = vunpack.c.l.b16 %v62
  %v218 = vunpack.c.l.b16 %v63
  %v219 = vunpack.c.l.b16 %v64
  %v220 = vunpack.c.l.b16 %v65
  %v221 = vunpack.c.l.b16 %v66
  %v222 = vunpack.c.l.b16 %v67
  %v223 = vunpack.c.l.b16 %v68
  %v224 = vunpack.c.l.b16 %v69
  %v225 = vunpack.c.l.b16 %v70
  %v226 = vunpack.c.l.b16 %v71
  %v227 = vunpack.c.l.b16 %v72
  %v228 = vunpack.c.l.b16 %v73
  %v229 = vunpack.c.l.b16 %v74
  %v230 = vunpack.c.l.b16 %v75
  %v231 = vunpack.c.l.b16 %v76
  %v232 = vunpack.c.l.b16 %v77
  %v233 = vunpack.c.l.b16 %v78
  %v234 = vunpack.c.l.b16 %v79
  %v235 = vunpack.c.l.b16 %v80
  %v236 = vunpack.c.l.b16 %v81
  %v237 = vunpack.c.l.b16 %v82
  %v238 = vunpack.c.l.b16 %v83
  %v239 = vunpack.c.l.b16 %v84
  %v240 = vunpack.c.l.b16 %v85
  %v241 = vunpack.c.l.b16 %v86
  %v242 = vunpack.c.l.b16 %v87
  %v243 = vunpack.c.l.b16 %v88
  %v244 = vpack.c.b16 %v181, %v180
  %v245 = vpack.c.b16 %v183, %v182
  %v246 = vpack.c.b16 %v185, %v184
  %v247 = vpack.c.b16 %v187, %v186
  %v248 = vpack.c.b16 %v189, %v188
  %v249 = vpack.c.b16 %v191, %v190
  %v250 = vpack.c.b16 %v193, %v192
  %v251 = vpack.c.b16 %v195, %v194
  %v252 = vpack.c.b16 %v197, %v196
  %v253 = vpack.c.b16 %v199, %v198
  %v254 = vpack.c.b16 %v201, %v200
  %v255 = vpack.c.b16 %v203, %v202
  %v256 = vpack.c.b16 %v205, %v204
  %v257 = vpack.c.b16 %v207, %v206
  %v258 = vpack.c.b16 %v209, %v208
  %v259 = vpack.c.b16 %v211, %v210
  %v260 = vpack.c.b16 %v213, %v212
  %v261 = vpack.c.b16 %v215, %v214
  %v262 = vpack.c.b16 %v217, %v216
  %v263 = vpack.c.b16 %v219, %v218
  %v264 = vpack.c.b16 %v221, %v220
  %v265 = vpack.c.b16 %v223, %v222
  %v266 = vpack.c.b16 %v225, %v224
  %v267 = vpack.c.b16 %v227, %v226
  %v268 = vpack.c.b16 %v229, %v228
  %v269 = vpack.c.b16 %v231, %v230
  %v270 = vpack.c.b16 %v233, %v232
  %v271 = vpack.c.b16 %v235, %v234
  %v272 = vpack.c.b16 %v237, %v236
  %v273 = vpack.c.b16 %v239, %v238
  %v274 = vpack.c.b16 %v241, %v240
  %v275 = vpack.c.b16 %v243, %v242
  %308 = vmatprep.subr.bf16.mxu0 0
  %309 = vmatpush1.bf16.msra.mxu0 %v251
  %310 = vmatprep.subr.bf16.mxu0 0
  %311 = vmatpush1.bf16.msra.mxu0 %v250
  %312 = vmatprep.subr.bf16.mxu0 0
  %313 = vmatpush1.bf16.msra.mxu0 %v249
  %314 = vmatprep.subr.bf16.mxu0 0
  %315 = vmatpush1.bf16.msra.mxu0 %v248
  %316 = vmatprep.subr.bf16.mxu0 0
  %317 = vmatpush1.bf16.msra.mxu0 %v247
  %318 = vmatprep.subr.bf16.mxu0 0
  %319 = vmatpush1.bf16.msra.mxu0 %v246
  %320 = vmatprep.subr.bf16.mxu0 0
  %321 = vmatpush1.bf16.msra.mxu0 %v245
  %322 = vmatprep.subr.bf16.mxu0 0
  %323 = vmatpush1.bf16.msra.mxu0 %v244
  %324 = vmatprep.subr.bf16.mxu0 0
  %325 = vmatpush2.bf16.msra.mxu0 %v259
  %326 = vmatprep.subr.bf16.mxu0 0
  %327 = vmatpush2.bf16.msra.mxu0 %v258
  %328 = vmatprep.subr.bf16.mxu0 0
  %329 = vmatpush2.bf16.msra.mxu0 %v257
  %330 = vmatprep.subr.bf16.mxu0 0
  %331 = vmatpush2.bf16.msra.mxu0 %v256
  %332 = vmatprep.subr.bf16.mxu0 0
  %333 = vmatpush2.bf16.msra.mxu0 %v255
  %334 = vmatprep.subr.bf16.mxu0 0
  %335 = vmatpush2.bf16.msra.mxu0 %v254
  %336 = vmatprep.subr.bf16.mxu0 0
  %337 = vmatpush2.bf16.msra.mxu0 %v253
  %338 = vmatprep.subr.bf16.mxu0 0
  %339 = vmatpush2.bf16.msra.mxu0 %v252
  %340 = vmatprep.mubr.bf16.mxu0 %v109
  %341 = vmatmul.mubr.bf16.gmra.mxu0 %v108
  %v342 = vpop.f32.mrf.mxu0
  %v343 = vadd.f32 %v94, %v342
  %v344 = vpop.f32.mrf.mxu0
  %v345 = vpop.f32.mrf.mxu0
  %v346 = vadd.f32 %v94, %v345
  %v347 = vpop.f32.mrf.mxu0
  %348 = vdwg.mxu0
  %349 = vmatprep.subr.bf16.mxu0 0
  %350 = vmatpush1.bf16.msra.mxu0 %v267
  %351 = vmatprep.subr.bf16.mxu0 0
  %352 = vmatpush1.bf16.msra.mxu0 %v266
  %353 = vmatprep.subr.bf16.mxu0 0
  %354 = vmatpush1.bf16.msra.mxu0 %v265
  %355 = vmatprep.subr.bf16.mxu0 0
  %356 = vmatpush1.bf16.msra.mxu0 %v264
  %357 = vmatprep.subr.bf16.mxu0 0
  %358 = vmatpush1.bf16.msra.mxu0 %v263
  %359 = vmatprep.subr.bf16.mxu0 0
  %360 = vmatpush1.bf16.msra.mxu0 %v262
  %361 = vmatprep.subr.bf16.mxu0 0
  %362 = vmatpush1.bf16.msra.mxu0 %v261
  %363 = vmatprep.subr.bf16.mxu0 0
  %364 = vmatpush1.bf16.msra.mxu0 %v260
  %365 = vmatprep.subr.bf16.mxu0 0
  %366 = vmatpush2.bf16.msra.mxu0 %v275
  %367 = vmatprep.subr.bf16.mxu0 0
  %368 = vmatpush2.bf16.msra.mxu0 %v274
  %369 = vmatprep.subr.bf16.mxu0 0
  %370 = vmatpush2.bf16.msra.mxu0 %v273
  %371 = vmatprep.subr.bf16.mxu0 0
  %372 = vmatpush2.bf16.msra.mxu0 %v272
  %373 = vmatprep.subr.bf16.mxu0 0
  %374 = vmatpush2.bf16.msra.mxu0 %v271
  %375 = vmatprep.subr.bf16.mxu0 0
  %376 = vmatpush2.bf16.msra.mxu0 %v270
  %377 = vmatprep.subr.bf16.mxu0 0
  %378 = vmatpush2.bf16.msra.mxu0 %v269
  %379 = vmatprep.subr.bf16.mxu0 0
  %380 = vmatpush2.bf16.msra.mxu0 %v268
  %381 = vmatprep.mubr.bf16.mxu0 %v111
  %382 = vmatmul.mubr.bf16.gmra.mxu0 %v110
  %v383 = vpop.f32.mrf.mxu0
  %v384 = vadd.f32 %v343, %v383
  %v385 = vpop.f32.mrf.mxu0
  %v386 = vpop.f32.mrf.mxu0
  %v387 = vadd.f32 %v346, %v386
  %v388 = vpop.f32.mrf.mxu0
  %389 = vdwg.mxu0
  %v390 = vmax.f32 %v384, 0.0
  %v391 = vmax.f32 %v387, 0.0
  %v392 = vpack.c.bf16 %v391, %v390
  %v393 = vld [vmem:[%s3] sm:$0xf]
  %v394 = vld [vmem:[%s3 + $0x4] sm:$0xf]
  %v395 = vld [vmem:[%s3 + $0x8] sm:$0xf]
  %v396 = vld [vmem:[%s3 + $0xc] sm:$0xf]
  %v397 = vld [vmem:[%s3 + $0x10] sm:$0xf]
  %v398 = vld [vmem:[%s3 + $0x14] sm:$0xf]
  %v399 = vld [vmem:[%s3 + $0x18] sm:$0xf]
  %v400 = vld [vmem:[%s3 + $0x1c] sm:$0xf]
  %v401 = vld [vmem:[%s4] sm:$0x1]
  %v403 = vlaneseq
  %v404 = vshrl.u32 %v403, 7
  %v405 = vsub.s32 0, %v404
  %v406 = vrot.slane %v401, %v405
  %v416 = vunpack.c.l.b16 %v393
  %v417 = vunpack.c.l.b16 %v394
  %v418 = vunpack.c.l.b16 %v395
  %v419 = vunpack.c.l.b16 %v396
  %v420 = vunpack.c.l.b16 %v397
  %v421 = vunpack.c.l.b16 %v398
  %v422 = vunpack.c.l.b16 %v399
  %v423 = vunpack.c.l.b16 %v400
  %v424 = vpack.c.b16 %v417, %v416
  %v425 = vpack.c.b16 %v419, %v418
  %v426 = vpack.c.b16 %v421, %v420
  %v427 = vpack.c.b16 %v423, %v422
  %vm432 = vcmask 523264
  %v434 = vsel %vm432, %v392, 0
  %436 = vmatprep.subr.bf16.mxu0 0
  %437 = vmatpush1.bf16.msra.mxu0 0
  %438 = vmatprep.subr.bf16.mxu0 0
  %439 = vmatpush1.bf16.msra.mxu0 0
  %440 = vmatprep.subr.bf16.mxu0 0
  %441 = vmatpush1.bf16.msra.mxu0 0
  %442 = vmatprep.subr.bf16.mxu0 0
  %443 = vmatpush1.bf16.msra.mxu0 0
  %444 = vmatprep.subr.bf16.mxu0 0
  %445 = vmatpush1.bf16.msra.mxu0 %v427
  %446 = vmatprep.subr.bf16.mxu0 0
  %447 = vmatpush1.bf16.msra.mxu0 %v426
  %448 = vmatprep.subr.bf16.mxu0 0
  %449 = vmatpush1.bf16.msra.mxu0 %v425
  %450 = vmatprep.subr.bf16.mxu0 0
  %451 = vmatpush1.bf16.msra.mxu0 %v424
  %452 = vmatprep.subr.bf16.mxu0 0
  %453 = vmatpush2.bf16.msra.mxu0 0
  %454 = vmatprep.subr.bf16.mxu0 0
  %455 = vmatpush2.bf16.msra.mxu0 0
  %456 = vmatprep.subr.bf16.mxu0 0
  %457 = vmatpush2.bf16.msra.mxu0 0
  %458 = vmatprep.subr.bf16.mxu0 0
  %459 = vmatpush2.bf16.msra.mxu0 0
  %460 = vmatprep.subr.bf16.mxu0 0
  %461 = vmatpush2.bf16.msra.mxu0 0
  %462 = vmatprep.subr.bf16.mxu0 0
  %463 = vmatpush2.bf16.msra.mxu0 0
  %464 = vmatprep.subr.bf16.mxu0 0
  %465 = vmatpush2.bf16.msra.mxu0 0
  %466 = vmatprep.subr.bf16.mxu0 0
  %467 = vmatpush2.bf16.msra.mxu0 0
  %468 = vmatprep.mubr.bf16.mxu0 0
  %469 = vmatmul.mubr.bf16.gmra.mxu0 %v434
  %v470 = vpop.f32.mrf.mxu0
  %v471 = vadd.f32 %v406, %v470
  %v472 = vpop.f32.mrf.mxu0
  %v473 = vpop.f32.mrf.mxu0
  %v474 = vadd.f32 %v406, %v473
  %v475 = vpop.f32.mrf.mxu0
  %476 = vdwg.mxu0
  %vm477 = vcmask 130048
  %v478 = vsel %vm477, %v471, -inf
  %479 = vmax.xlane.f32.xlu0 %v478
  %v480 = vpop.xlane.xlu0 %479
  %v481 = vsel %vm477, %v474, -inf
  %482 = vmax.xlane.f32.xlu0 %v481
  %v483 = vpop.xlane.xlu0 %482
  %v484 = vsub.f32 %v471, %v480
  %v485 = vsub.f32 %v474, %v483
  %v486 = vmul.f32 %v484, 1.442695
  %v487 = vpow.pop %v486
  %v488 = vmul.f32 %v485, 1.442695
  %v489 = vpow.pop %v488
  %v490 = vsel %vm477, %v487, 0.0
  %491 = vadd.xlane.f32.xlu0 %v490
  %v492 = vpop.xlane.xlu0 %491
  %v493 = vsel %vm477, %v489, 0.0
  %494 = vadd.xlane.f32.xlu0 %v493
  %v495 = vpop.xlane.xlu0 %494
  %v496 = vlog2.pop %v492
  %v497 = vmul.f32 %v496, 0.6931472
  %v498 = vlog2.pop %v495
  %v499 = vmul.f32 %v498, 0.6931472
  %v500 = vsub.f32 %v484, %v497
  %v501 = vsub.f32 %v485, %v499
  %502 = vst.msk [vmem:[%s5] sm:$0xff] %vm477, %v500
  %503 = vst.msk [vmem:[%s5 + $0x8] sm:$0xff] %vm477, %v501
  // Predicated region
  $region22: #{net_forward.5} parent=0 // pred_check
    _
  $region23: #{net_forward.5} parent=0 // pred_check_branch
    %505 = sbr.rel (0) target = $region25
  $region24: #{net_forward.5} parent=0 // pred_region
    _
  $region25: #{net_forward.5} parent=0 // pred_fallthru
    _
  // Predicated region
  $region26: #{net_forward.5} parent=0 // pred_check
    _
  $region27: #{net_forward.5} parent=0 // pred_check_branch
    %507 = sbr.rel (0) target = $region29
  $region28: #{net_forward.5} parent=0 // pred_region
    _
  $region29: #{net_forward.5} parent=0 // pred_fallthru
    _

// kernel: net_forward.4
$region0: #{net_forward.4}
  #allocation0 [shape = 'u32[]', space=smem, size = 0x4, offset = 0x4, fixed_abs, tag = 'smem constant byte address 0x4 - core index']
  #allocation1 [shape = 'u32[144,128]{1,0:T(1,128)}', space=vmem, size = 0x12000, scoped, tag = 'internal scratch']
  %s0 = inlined_call_operand.vmem [shape: bf16[32,576], index: 0, kind: input, shape index: {}]
  %s1 = inlined_call_operand.vmem [shape: bf16[576,128], index: 1, kind: input, shape index: {}]
  %s2 = inlined_call_operand.vmem [shape: f32[1,32], index: 2, kind: input, shape index: {}]
  %s3 = inlined_call_operand.vmem [shape: bf16[32,32], index: 3, kind: output, shape index: {}]
  %s4 = sld [smem:[#allocation0]]
  $region45: #{net_forward.4} parent=0
    _
  %s6 = ssub.s32 1, %s4
  %s7 = scalar_select 0, %s6, %s4
  loop: start=0, step=1, limit=4
  $region2: #{net_forward.4} parent=0 // loop_pre_header
    _
  $region3: #{net_forward.4} parent=0 // loop_header
    %s9 = sphi 0, %s13
    %p10 = scmp.ge.s32.totalorder %s9, 4
    %s19 = sphi 0, %s21
    %s22 = sphi 0, %s19
    %s23 = sphi 0, %s22
    %s39 = sphi 0, %s23
    %s43 = sphi 0, %s43
    %s45 = sphi 0, %s43
    %s46 = sphi 0, %s45
    %s60 = sphi 0, %s46
    %s64 = sphi 0, %s64
    %s66 = sphi 0, %s64
    %s67 = sphi 0, %s66
    %s81 = sphi 0, %s67
    %s87 = sphi 0, %s89
    %s90 = sphi 0, %s87
    %s91 = sphi 0, %s90
    %s107 = sphi 0, %s91
  $region4: #{net_forward.4} parent=0 // loop_header_branch
    %12 = sbr.rel (%p10) target = $region8
  $region5: #{net_forward.4} parent=0 // loop_body
    %s14 = ssub.s32 %s9, 1
    %s15 = ssub.s32 %s9, 2
    %s16 = sadd.s32 %s9, 1
    %s17 = ssub.s32 %s9, %s16
    %p18 = scmp.eq.s32.totalorder %s17, 0
    %s20 = sadd.s32 %s19, 1
    %s21 = scalar_select %p18, %s19, %s20
    %p24 = pneg %p18
    %p25 = scmp.eq.s32.totalorder %s9, 1
    %p26 = por %p24, %p25
    %p27 = scmp.ne.s32.totalorder %s19, %s22
    %p28 = scmp.eq.s32.totalorder %s9, 0
    %p29 = por %p27, %p28
    %p30 = scmp.ne.s32.totalorder %s19, %s22
    %p31 = scmp.eq.s32.totalorder %s14, 1
    %p32 = por %p30, %p31
    %p33 = scmp.ne.s32.totalorder %s22, %s23
    %p34 = scmp.eq.s32.totalorder %s14, 0
    %p35 = por %p33, %p34
    %p36 = scmp.ne.s32.totalorder %s22, %s23
    %p37 = scmp.eq.s32.totalorder %s15, 1
    %p38 = por %p36, %p37
    %p40 = scmp.ne.s32.totalorder %s23, %s39
    %p41 = scmp.eq.s32.totalorder %s15, 0
    %p42 = por %p40, %p41
    %s44 = sadd.s32 %s43, 1
    %p47 = scmp.eq.s32.totalorder %s9, 1
    %p48 = scmp.ne.s32.totalorder %s43, %s45
    %p49 = scmp.eq.s32.totalorder %s9, 0
    %p50 = por %p48, %p49
    %p51 = scmp.ne.s32.totalorder %s43, %s45
    %p52 = scmp.eq.s32.totalorder %s14, 1
    %p53 = por %p51, %p52
    %p54 = scmp.ne.s32.totalorder %s45, %s46
    %p55 = scmp.eq.s32.totalorder %s14, 0
    %p56 = por %p54, %p55
    %p57 = scmp.ne.s32.totalorder %s45, %s46
    %p58 = scmp.eq.s32.totalorder %s15, 1
    %p59 = por %p57, %p58
    %p61 = scmp.ne.s32.totalorder %s46, %s60
    %p62 = scmp.eq.s32.totalorder %s15, 0
    %p63 = por %p61, %p62
    %s65 = sadd.s32 %s64, 1
    %p68 = scmp.eq.s32.totalorder %s9, 1
    %p69 = scmp.ne.s32.totalorder %s64, %s66
    %p70 = scmp.eq.s32.totalorder %s9, 0
    %p71 = por %p69, %p70
    %p72 = scmp.ne.s32.totalorder %s64, %s66
    %p73 = scmp.eq.s32.totalorder %s14, 1
    %p74 = por %p72, %p73
    %p75 = scmp.ne.s32.totalorder %s66, %s67
    %p76 = scmp.eq.s32.totalorder %s14, 0
    %p77 = por %p75, %p76
    %p78 = scmp.ne.s32.totalorder %s66, %s67
    %p79 = scmp.eq.s32.totalorder %s15, 1
    %p80 = por %p78, %p79
    %p82 = scmp.ne.s32.totalorder %s67, %s81
    %p83 = scmp.eq.s32.totalorder %s15, 0
    %p84 = por %p82, %p83
    %s85 = ssub.s32 %s9, %s16
    %p86 = scmp.eq.s32.totalorder %s85, 0
    %s88 = sadd.s32 %s87, 1
    %s89 = scalar_select %p86, %s87, %s88
    %p92 = pneg %p86
    %p93 = scmp.eq.s32.totalorder %s9, 1
    %p94 = por %p92, %p93
    %p95 = scmp.ne.s32.totalorder %s87, %s90
    %p96 = scmp.eq.s32.totalorder %s9, 0
    %p97 = por %p95, %p96
    %p98 = scmp.ne.s32.totalorder %s87, %s90
    %p99 = scmp.eq.s32.totalorder %s14, 1
    %p100 = por %p98, %p99
    %p101 = scmp.ne.s32.totalorder %s90, %s91
    %p102 = scmp.eq.s32.totalorder %s14, 0
    %p103 = por %p101, %p102
    %p104 = scmp.ne.s32.totalorder %s90, %s91
    %p105 = scmp.eq.s32.totalorder %s15, 1
    %p106 = por %p104, %p105
    %p108 = scmp.ne.s32.totalorder %s91, %s107
    %p109 = scmp.eq.s32.totalorder %s15, 0
    %p110 = por %p108, %p109
    %p111 = scmp.le.s32.totalorder 1, %s9
    %p112 = scmp.lt.s32.totalorder %s9, 3
    %p113 = pnand %p111, %p112
    %p114 = pneg %p113
    // Predicated region
    $region9: #{net_forward.4} parent=5 // pred_check
      _
    $region10: #{net_forward.4} parent=5 // pred_check_branch
      %116 = sbr.rel (%p113) target = $region12
    $region11: #{net_forward.4} parent=5 // pred_region
      %s117 = ssub.s32 %s9, 1
      // Predicated region
      $region13: #{net_forward.4} parent=11 // pred_check
        %p118 = pneg %p56
      $region14: #{net_forward.4} parent=11 // pred_check_branch
        %120 = sbr.rel (%p118) target = $region16
      $region15: #{net_forward.4} parent=11 // pred_region
        _
      $region16: #{net_forward.4} parent=11 // pred_fallthru
        _
      // Predicated region
      $region17: #{net_forward.4} parent=11 // pred_check
        %p121 = pneg %p77
      $region18: #{net_forward.4} parent=11 // pred_check_branch
        %123 = sbr.rel (%p121) target = $region20
      $region19: #{net_forward.4} parent=11 // pred_region
        _
      $region20: #{net_forward.4} parent=11 // pred_fallthru
        _
    $region12: #{net_forward.4} parent=5 // pred_fallthru
      _
    %p124 = scmp.lt.s32.totalorder %s9, 2
    // Predicated region
    $region21: #{net_forward.4} parent=5 // pred_check
      %p125 = pneg %p124
    $region22: #{net_forward.4} parent=5 // pred_check_branch
      %127 = sbr.rel (%p125) target = $region24
    $region23: #{net_forward.4} parent=5 // pred_region
      // Predicated region
      $region25: #{net_forward.4} parent=23 // pred_check
        %p128 = pneg %p29
      $region26: #{net_forward.4} parent=23 // pred_check_branch
        %130 = sbr.rel (%p128) target = $region28
      $region27: #{net_forward.4} parent=23 // pred_region
        %s131 = smul.u32 2, %s9
        %p132 = scmp.lt.s32.totalorder %s131, 3
        %s133 = scalar_select %p132, %s131, 3
        %s134 = smul.addr %s133, 5
        %s135 = smul.addr %s134, 4
        %s136 = scalar_lea.vmem %s0, %s135
        %s137 = smul.u32 2, %s9
      $region28: #{net_forward.4} parent=23 // pred_fallthru
        _
    $region24: #{net_forward.4} parent=5 // pred_fallthru
      _
    %p138 = scmp.le.s32.totalorder 1, %s9
    %p139 = scmp.lt.s32.totalorder %s9, 3
    %p140 = pnand %p138, %p139
    %p141 = pneg %p140
    // Predicated region
    $region29: #{net_forward.4} parent=5 // pred_check
      _
    $region30: #{net_forward.4} parent=5 // pred_check_branch
      %143 = sbr.rel (%p140) target = $region32
    $region31: #{net_forward.4} parent=5 // pred_region
      %s144 = ssub.s32 %s9, 1
      %s145 = smul.u32 2, %s14
      %p146 = scmp.lt.s32.totalorder %s145, 3
      %s147 = scalar_select %p146, %s145, 3
      %s148 = smul.addr %s147, 5
      %s149 = smul.addr %s148, 4
      %s150 = scalar_lea.vmem %s0, %s149
      %p151 = pneg %p35
      %p152 = pneg %p32
      %p153 = pneg %p56
      %p154 = pneg %p53
      %p155 = pneg %p77
      %p156 = pneg %p74
      %p157 = pneg %p103
      %p158 = pneg %p100
      %s159 = smul.u32 2, %s14
      %p160 = scmp.lt.s32.totalorder %s159, 3
      %s161 = scalar_select %p160, %s159, 3
      %s162 = smul.addr %s161, 4
      %s163 = scalar_lea.vmem %s3, %s162
      %s164 = smul.u32 2, %s14
      %p165 = scmp.lt.s32.totalorder %s164, 3
      %s166 = scalar_select %p165, %s164, 3
      %s167 = smul.addr %s166, 5
      %s168 = smul.addr %s167, 4
      %s169 = scalar_lea.vmem %s0, %s168
      %s170 = smul.u32 2, %s14
      %s171 = smul.u32 2, %s14
      %p172 = scmp.lt.s32.totalorder %s171, 3
      %s173 = scalar_select %p172, %s171, 3
      %s174 = smul.addr %s173, 4
      %s175 = scalar_lea.vmem %s3, %s174
      %s176 = smul.u32 2, %s14
      %v178 = vld [vmem:[%s169] sm:$0xff]
      %v179 = vld [vmem:[%s169 + $0x8] sm:$0xff]
      %v180 = vld [vmem:[%s169 + $0x10] sm:$0xf]
      %v181 = vld [vmem:[%s169 + $0x14] sm:$0xff]
      %v182 = vld [vmem:[%s169 + $0x1c] sm:$0xff]
      %v183 = vld [vmem:[%s169 + $0x24] sm:$0xf]
      %v184 = vld [vmem:[%s1] sm:$0xf]
      %v185 = vld [vmem:[%s1 + $0x4] sm:$0xf]
      %v186 = vld [vmem:[%s1 + $0x8] sm:$0xf]
      %v187 = vld [vmem:[%s1 + $0xc] sm:$0xf]
      %v188 = vld [vmem:[%s1 + $0x10] sm:$0xf]
      %v189 = vld [vmem:[%s1 + $0x14] sm:$0xf]
      %v190 = vld [vmem:[%s1 + $0x18] sm:$0xf]
      %v191 = vld [vmem:[%s1 + $0x1c] sm:$0xf]
      %v192 = vld [vmem:[%s1 + $0x20] sm:$0xf]
      %v193 = vld [vmem:[%s1 + $0x24] sm:$0xf]
      %v194 = vld [vmem:[%s1 + $0x28] sm:$0xf]
      %v195 = vld [vmem:[%s1 + $0x2c] sm:$0xf]
      %v196 = vld [vmem:[%s1 + $0x30] sm:$0xf]
      %v197 = vld [vmem:[%s1 + $0x34] sm:$0xf]
      %v198 = vld [vmem:[%s1 + $0x38] sm:$0xf]
      %v199 = vld [vmem:[%s1 + $0x3c] sm:$0xf]
      %v200 = vld [vmem:[%s1 + $0x40] sm:$0xf]
      %v201 = vld [vmem:[%s1 + $0x44] sm:$0xf]
      %v202 = vld [vmem:[%s1 + $0x48] sm:$0xf]
      %v203 = vld [vmem:[%s1 + $0x4c] sm:$0xf]
      %v204 = vld [vmem:[%s1 + $0x50] sm:$0xf]
      %v205 = vld [vmem:[%s1 + $0x54] sm:$0xf]
      %v206 = vld [vmem:[%s1 + $0x58] sm:$0xf]
      %v207 = vld [vmem:[%s1 + $0x5c] sm:$0xf]
      %v208 = vld [vmem:[%s1 + $0x60] sm:$0xf]
      %v209 = vld [vmem:[%s1 + $0x64] sm:$0xf]
      %v210 = vld [vmem:[%s1 + $0x68] sm:$0xf]
      %v211 = vld [vmem:[%s1 + $0x6c] sm:$0xf]
      %v212 = vld [vmem:[%s1 + $0x70] sm:$0xf]
      %v213 = vld [vmem:[%s1 + $0x74] sm:$0xf]
      %v214 = vld [vmem:[%s1 + $0x78] sm:$0xf]
      %v215 = vld [vmem:[%s1 + $0x7c] sm:$0xf]
      %v216 = vld [vmem:[%s1 + $0x80] sm:$0xf]
      %v217 = vld [vmem:[%s1 + $0x84] sm:$0xf]
      %v218 = vld [vmem:[%s1 + $0x88] sm:$0xf]
      %v219 = vld [vmem:[%s1 + $0x8c] sm:$0xf]
      %v220 = vld [vmem:[%s1 + $0x90] sm:$0xf]
      %v221 = vld [vmem:[%s1 + $0x94] sm:$0xf]
      %v222 = vld [vmem:[%s1 + $0x98] sm:$0xf]
      %v223 = vld [vmem:[%s1 + $0x9c] sm:$0xf]
      %v224 = vld [vmem:[%s1 + $0xa0] sm:$0xf]
      %v225 = vld [vmem:[%s1 + $0xa4] sm:$0xf]
      %v226 = vld [vmem:[%s1 + $0xa8] sm:$0xf]
      %v227 = vld [vmem:[%s1 + $0xac] sm:$0xf]
      %v228 = vld [vmem:[%s1 + $0xb0] sm:$0xf]
      %v229 = vld [vmem:[%s1 + $0xb4] sm:$0xf]
      %v230 = vld [vmem:[%s1 + $0xb8] sm:$0xf]
      %v231 = vld [vmem:[%s1 + $0xbc] sm:$0xf]
      %v232 = vld [vmem:[%s1 + $0xc0] sm:$0xf]
      %v233 = vld [vmem:[%s1 + $0xc4] sm:$0xf]
      %v234 = vld [vmem:[%s1 + $0xc8] sm:$0xf]
      %v235 = vld [vmem:[%s1 + $0xcc] sm:$0xf]
      %v236 = vld [vmem:[%s1 + $0xd0] sm:$0xf]
      %v237 = vld [vmem:[%s1 + $0xd4] sm:$0xf]
      %v238 = vld [vmem:[%s1 + $0xd8] sm:$0xf]
      %v239 = vld [vmem:[%s1 + $0xdc] sm:$0xf]
      %v240 = vld [vmem:[%s1 + $0xe0] sm:$0xf]
      %v241 = vld [vmem:[%s1 + $0xe4] sm:$0xf]
      %v242 = vld [vmem:[%s1 + $0xe8] sm:$0xf]
      %v243 = vld [vmem:[%s1 + $0xec] sm:$0xf]
      %v244 = vld [vmem:[%s1 + $0xf0] sm:$0xf]
      %v245 = vld [vmem:[%s1 + $0xf4] sm:$0xf]
      %v246 = vld [vmem:[%s1 + $0xf8] sm:$0xf]
      %v247 = vld [vmem:[%s1 + $0xfc] sm:$0xf]
      %v248 = vld [vmem:[%s1 + $0x100] sm:$0xf]
      %v249 = vld [vmem:[%s1 + $0x104] sm:$0xf]
      %v250 = vld [vmem:[%s1 + $0x108] sm:$0xf]
      %v251 = vld [vmem:[%s1 + $0x10c] sm:$0xf]
      %v252 = vld [vmem:[%s1 + $0x110] sm:$0xf]
      %v253 = vld [vmem:[%s1 + $0x114] sm:$0xf]
      %v254 = vld [vmem:[%s1 + $0x118] sm:$0xf]
      %v255 = vld [vmem:[%s1 + $0x11c] sm:$0xf]
      %v262 = vunpack.c.l.b16 %v178
      %v263 = vunpack.c.h.b16 %v178
      %v264 = vunpack.c.l.b16 %v179
      %v265 = vunpack.c.h.b16 %v179
      %v266 = vunpack.c.l.b16 %v180
      %v267 = vunpack.c.l.b16 %v181
      %v268 = vunpack.c.h.b16 %v181
      %v269 = vunpack.c.l.b16 %v182
      %v270 = vunpack.c.h.b16 %v182
      %v271 = vunpack.c.l.b16 %v183
      %v272 = vpack.c.b16 %v267, %v262
      %v273 = vpack.c.b16 %v268, %v263
      %v274 = vpack.c.b16 %v269, %v264
      %v275 = vpack.c.b16 %v270, %v265
      %v276 = vpack.c.b16 %v271, %v266
      %v353 = vunpack.c.l.b16 %v184
      %v354 = vunpack.c.l.b16 %v185
      %v355 = vunpack.c.l.b16 %v186
      %v356 = vunpack.c.l.b16 %v187
      %v357 = vunpack.c.l.b16 %v188
      %v358 = vunpack.c.l.b16 %v189
      %v359 = vunpack.c.l.b16 %v190
      %v360 = vunpack.c.l.b16 %v191
      %v361 = vunpack.c.l.b16 %v192
      %v362 = vunpack.c.l.b16 %v193
      %v363 = vunpack.c.l.b16 %v194
      %v364 = vunpack.c.l.b16 %v195
      %v365 = vunpack.c.l.b16 %v196
      %v366 = vunpack.c.l.b16 %v197
      %v367 = vunpack.c.l.b16 %v198
      %v368 = vunpack.c.l.b16 %v199
      %v369 = vunpack.c.l.b16 %v200
      %v370 = vunpack.c.l.b16 %v201
      %v371 = vunpack.c.l.b16 %v202
      %v372 = vunpack.c.l.b16 %v203
      %v373 = vunpack.c.l.b16 %v204
      %v374 = vunpack.c.l.b16 %v205
      %v375 = vunpack.c.l.b16 %v206
      %v376 = vunpack.c.l.b16 %v207
      %v377 = vunpack.c.l.b16 %v208
      %v378 = vunpack.c.l.b16 %v209
      %v379 = vunpack.c.l.b16 %v210
      %v380 = vunpack.c.l.b16 %v211
      %v381 = vunpack.c.l.b16 %v212
      %v382 = vunpack.c.l.b16 %v213
      %v383 = vunpack.c.l.b16 %v214
      %v384 = vunpack.c.l.b16 %v215
      %v385 = vunpack.c.l.b16 %v216
      %v386 = vunpack.c.l.b16 %v217
      %v387 = vunpack.c.l.b16 %v218
      %v388 = vunpack.c.l.b16 %v219
      %v389 = vunpack.c.l.b16 %v220
      %v390 = vunpack.c.l.b16 %v221
      %v391 = vunpack.c.l.b16 %v222
      %v392 = vunpack.c.l.b16 %v223
      %v393 = vunpack.c.l.b16 %v224
      %v394 = vunpack.c.l.b16 %v225
      %v395 = vunpack.c.l.b16 %v226
      %v396 = vunpack.c.l.b16 %v227
      %v397 = vunpack.c.l.b16 %v228
      %v398 = vunpack.c.l.b16 %v229
      %v399 = vunpack.c.l.b16 %v230
      %v400 = vunpack.c.l.b16 %v231
      %v401 = vunpack.c.l.b16 %v232
      %v402 = vunpack.c.l.b16 %v233
      %v403 = vunpack.c.l.b16 %v234
      %v404 = vunpack.c.l.b16 %v235
      %v405 = vunpack.c.l.b16 %v236
      %v406 = vunpack.c.l.b16 %v237
      %v407 = vunpack.c.l.b16 %v238
      %v408 = vunpack.c.l.b16 %v239
      %v409 = vunpack.c.l.b16 %v240
      %v410 = vunpack.c.l.b16 %v241
      %v411 = vunpack.c.l.b16 %v242
      %v412 = vunpack.c.l.b16 %v243
      %v413 = vunpack.c.l.b16 %v244
      %v414 = vunpack.c.l.b16 %v245
      %v415 = vunpack.c.l.b16 %v246
      %v416 = vunpack.c.l.b16 %v247
      %v417 = vunpack.c.l.b16 %v248
      %v418 = vunpack.c.l.b16 %v249
      %v419 = vunpack.c.l.b16 %v250
      %v420 = vunpack.c.l.b16 %v251
      %v421 = vunpack.c.l.b16 %v252
      %v422 = vunpack.c.l.b16 %v253
      %v423 = vunpack.c.l.b16 %v254
      %v424 = vunpack.c.l.b16 %v255
      %v425 = vpack.c.b16 %v354, %v353
      %v426 = vpack.c.b16 %v356, %v355
      %v427 = vpack.c.b16 %v358, %v357
      %v428 = vpack.c.b16 %v360, %v359
      %v429 = vpack.c.b16 %v362, %v361
      %v430 = vpack.c.b16 %v364, %v363
      %v431 = vpack.c.b16 %v366, %v365
      %v432 = vpack.c.b16 %v368, %v367
      %v433 = vpack.c.b16 %v370, %v369
      %v434 = vpack.c.b16 %v372, %v371
      %v435 = vpack.c.b16 %v374, %v373
      %v436 = vpack.c.b16 %v376, %v375
      %v437 = vpack.c.b16 %v378, %v377
      %v438 = vpack.c.b16 %v380, %v379
      %v439 = vpack.c.b16 %v382, %v381
      %v440 = vpack.c.b16 %v384, %v383
      %v441 = vpack.c.b16 %v386, %v385
      %v442 = vpack.c.b16 %v388, %v387
      %v443 = vpack.c.b16 %v390, %v389
      %v444 = vpack.c.b16 %v392, %v391
      %v445 = vpack.c.b16 %v394, %v393
      %v446 = vpack.c.b16 %v396, %v395
      %v447 = vpack.c.b16 %v398, %v397
      %v448 = vpack.c.b16 %v400, %v399
      %v449 = vpack.c.b16 %v402, %v401
      %v450 = vpack.c.b16 %v404, %v403
      %v451 = vpack.c.b16 %v406, %v405
      %v452 = vpack.c.b16 %v408, %v407
      %v453 = vpack.c.b16 %v410, %v409
      %v454 = vpack.c.b16 %v412, %v411
      %v455 = vpack.c.b16 %v414, %v413
      %v456 = vpack.c.b16 %v416, %v415
      %v457 = vpack.c.b16 %v418, %v417
      %v458 = vpack.c.b16 %v420, %v419
      %v459 = vpack.c.b16 %v422, %v421
      %v460 = vpack.c.b16 %v424, %v423
      %vm497 = vcmask 523264
      %v499 = vsel %vm497, %v276, 0
      %501 = vmatprep.subr.bf16.mxu0 0
      %502 = vmatpush1.bf16.msra.mxu0 %v432
      %503 = vmatprep.subr.bf16.mxu0 0
      %504 = vmatpush1.bf16.msra.mxu0 %v431
      %505 = vmatprep.subr.bf16.mxu0 0
      %506 = vmatpush1.bf16.msra.mxu0 %v430
      %507 = vmatprep.subr.bf16.mxu0 0
      %508 = vmatpush1.bf16.msra.mxu0 %v429
      %509 = vmatprep.subr.bf16.mxu0 0
      %510 = vmatpush1.bf16.msra.mxu0 %v428
      %511 = vmatprep.subr.bf16.mxu0 0
      %512 = vmatpush1.bf16.msra.mxu0 %v427
      %513 = vmatprep.subr.bf16.mxu0 0
      %514 = vmatpush1.bf16.msra.mxu0 %v426
      %515 = vmatprep.subr.bf16.mxu0 0
      %516 = vmatpush1.bf16.msra.mxu0 %v425
      %517 = vmatprep.subr.bf16.mxu0 0
      %518 = vmatpush2.bf16.msra.mxu0 %v440
      %519 = vmatprep.subr.bf16.mxu0 0
      %520 = vmatpush2.bf16.msra.mxu0 %v439
      %521 = vmatprep.subr.bf16.mxu0 0
      %522 = vmatpush2.bf16.msra.mxu0 %v438
      %523 = vmatprep.subr.bf16.mxu0 0
      %524 = vmatpush2.bf16.msra.mxu0 %v437
      %525 = vmatprep.subr.bf16.mxu0 0
      %526 = vmatpush2.bf16.msra.mxu0 %v436
      %527 = vmatprep.subr.bf16.mxu0 0
      %528 = vmatpush2.bf16.msra.mxu0 %v435
      %529 = vmatprep.subr.bf16.mxu0 0
      %530 = vmatpush2.bf16.msra.mxu0 %v434
      %531 = vmatprep.subr.bf16.mxu0 0
      %532 = vmatpush2.bf16.msra.mxu0 %v433
      %533 = vmatprep.mubr.bf16.mxu0 %v273
      %534 = vmatmul.mubr.bf16.gmra.mxu0 %v272
      %v535 = vpop.f32.mrf.mxu0
      %v536 = vadd.f32 0.0, %v535
      %v537 = vpop.f32.mrf.mxu0
      %v538 = vpop.f32.mrf.mxu0
      %v539 = vadd.f32 0.0, %v538
      %v540 = vpop.f32.mrf.mxu0
      %541 = vdwg.mxu0
      %542 = vmatprep.subr.bf16.mxu0 0
      %543 = vmatpush1.bf16.msra.mxu0 %v448
      %544 = vmatprep.subr.bf16.mxu0 0
      %545 = vmatpush1.bf16.msra.mxu0 %v447
      %546 = vmatprep.subr.bf16.mxu0 0
      %547 = vmatpush1.bf16.msra.mxu0 %v446
      %548 = vmatprep.subr.bf16.mxu0 0
      %549 = vmatpush1.bf16.msra.mxu0 %v445
      %550 = vmatprep.subr.bf16.mxu0 0
      %551 = vmatpush1.bf16.msra.mxu0 %v444
      %552 = vmatprep.subr.bf16.mxu0 0
      %553 = vmatpush1.bf16.msra.mxu0 %v443
      %554 = vmatprep.subr.bf16.mxu0 0
      %555 = vmatpush1.bf16.msra.mxu0 %v442
      %556 = vmatprep.subr.bf16.mxu0 0
      %557 = vmatpush1.bf16.msra.mxu0 %v441
      %558 = vmatprep.subr.bf16.mxu0 0
      %559 = vmatpush2.bf16.msra.mxu0 %v456
      %560 = vmatprep.subr.bf16.mxu0 0
      %561 = vmatpush2.bf16.msra.mxu0 %v455
      %562 = vmatprep.subr.bf16.mxu0 0
      %563 = vmatpush2.bf16.msra.mxu0 %v454
      %564 = vmatprep.subr.bf16.mxu0 0
      %565 = vmatpush2.bf16.msra.mxu0 %v453
      %566 = vmatprep.subr.bf16.mxu0 0
      %567 = vmatpush2.bf16.msra.mxu0 %v452
      %568 = vmatprep.subr.bf16.mxu0 0
      %569 = vmatpush2.bf16.msra.mxu0 %v451
      %570 = vmatprep.subr.bf16.mxu0 0
      %571 = vmatpush2.bf16.msra.mxu0 %v450
      %572 = vmatprep.subr.bf16.mxu0 0
      %573 = vmatpush2.bf16.msra.mxu0 %v449
      %574 = vmatprep.mubr.bf16.mxu0 %v275
      %575 = vmatmul.mubr.bf16.gmra.mxu0 %v274
      %v576 = vpop.f32.mrf.mxu0
      %v577 = vadd.f32 %v536, %v576
      %v578 = vpop.f32.mrf.mxu0
      %v579 = vpop.f32.mrf.mxu0
      %v580 = vadd.f32 %v539, %v579
      %v581 = vpop.f32.mrf.mxu0
      %582 = vdwg.mxu0
      %583 = vmatprep.subr.bf16.mxu0 0
      %584 = vmatpush1.bf16.msra.mxu0 0
      %585 = vmatprep.subr.bf16.mxu0 0
      %586 = vmatpush1.bf16.msra.mxu0 0
      %587 = vmatprep.subr.bf16.mxu0 0
      %588 = vmatpush1.bf16.msra.mxu0 0
      %589 = vmatprep.subr.bf16.mxu0 0
      %590 = vmatpush1.bf16.msra.mxu0 0
      %591 = vmatprep.subr.bf16.mxu0 0
      %592 = vmatpush1.bf16.msra.mxu0 %v460
      %593 = vmatprep.subr.bf16.mxu0 0
      %594 = vmatpush1.bf16.msra.mxu0 %v459
      %595 = vmatprep.subr.bf16.mxu0 0
      %596 = vmatpush1.bf16.msra.mxu0 %v458
      %597 = vmatprep.subr.bf16.mxu0 0
      %598 = vmatpush1.bf16.msra.mxu0 %v457
      %599 = vmatprep.subr.bf16.mxu0 0
      %600 = vmatpush2.bf16.msra.mxu0 0
      %601 = vmatprep.subr.bf16.mxu0 0
      %602 = vmatpush2.bf16.msra.mxu0 0
      %603 = vmatprep.subr.bf16.mxu0 0
      %604 = vmatpush2.bf16.msra.mxu0 0
      %605 = vmatprep.subr.bf16.mxu0 0
      %606 = vmatpush2.bf16.msra.mxu0 0
      %607 = vmatprep.subr.bf16.mxu0 0
      %608 = vmatpush2.bf16.msra.mxu0 0
      %609 = vmatprep.subr.bf16.mxu0 0
      %610 = vmatpush2.bf16.msra.mxu0 0
      %611 = vmatprep.subr.bf16.mxu0 0
      %612 = vmatpush2.bf16.msra.mxu0 0
      %613 = vmatprep.subr.bf16.mxu0 0
      %614 = vmatpush2.bf16.msra.mxu0 0
      %615 = vmatprep.mubr.bf16.mxu0 0
      %616 = vmatmul.mubr.bf16.gmra.mxu0 %v499
      %v617 = vpop.f32.mrf.mxu0
      %v618 = vadd.f32 %v577, %v617
      %v619 = vpop.f32.mrf.mxu0
      %v620 = vpop.f32.mrf.mxu0
      %v621 = vadd.f32 %v580, %v620
      %v622 = vpop.f32.mrf.mxu0
      %623 = vdwg.mxu0
      %626 = vrot.lane.b32.xlu0 %v618, 96
      %v627 = vpop.permute.xlu0 %626
      %628 = vrot.lane.b32.xlu0 %v621, 96
      %v629 = vpop.permute.xlu0 %628
      %v632 = vmax.f32 %v618, %v627
      %v633 = vmax.f32 %v621, %v629
      %636 = vrot.lane.b32.xlu0 %v632, 64
      %v637 = vpop.permute.xlu0 %636
      %638 = vrot.lane.b32.xlu0 %v633, 64
      %v639 = vpop.permute.xlu0 %638
      %v642 = vmax.f32 %v632, %v637
      %v643 = vmax.f32 %v633, %v639
      %v644 = vld [vmem:[%s2] sm:$0x1]
      %v646 = vlaneseq
      %v647 = vshrl.u32 %v646, 7
      %v648 = vsub.s32 0, %v647
      %v649 = vrot.slane %v644, %v648
      %v651 = vadd.f32 %v642, %v649
      %v652 = vadd.f32 %v643, %v649
      %v653 = vmax.f32 %v651, 0.0
      %v654 = vmax.f32 %v652, 0.0
      %v655 = vpack.c.bf16 %v654, %v653
      %v657 = vunpack.c.l.b16 %v655
      %v658 = vunpack.c.h.b16 %v655
      %v659 = vpack.c.b16 %v657, %v657
      %v660 = vpack.c.b16 %v658, %v658
      %vm663 = vcmask 257024
      %664 = vst.msk [vmem:[%s175] sm:$0xf] %vm663, %v659
      %665 = vst.msk [vmem:[%s175 + $0x4] sm:$0xf] %vm663, %v660
      %s666 = smul.u32 2, %s14
      %p667 = scmp.lt.s32.totalorder %s666, 3
      %s668 = scalar_select %p667, %s666, 3
      %s669 = smul.addr %s668, 4
      %s670 = scalar_lea.vmem %s3, %s669
      // Predicated region
      $region33: #{net_forward.4} parent=31 // pred_check
        %p671 = pneg %p100
      $region34: #{net_forward.4} parent=31 // pred_check_branch
        %673 = sbr.rel (%p671) target = $region36
      $region35: #{net_forward.4} parent=31 // pred_region
        %s674 = smul.u32 2, %s14
      $region36: #{net_forward.4} parent=31 // pred_fallthru
        _
    $region32: #{net_forward.4} parent=5 // pred_fallthru
      _
    %p675 = scmp.le.s32.totalorder 2, %s9
    // Predicated region
    $region37: #{net_forward.4} parent=5 // pred_check
      %p676 = pneg %p675
    $region38: #{net_forward.4} parent=5 // pred_check_branch
      %678 = sbr.rel (%p676) target = $region40
    $region39: #{net_forward.4} parent=5 // pred_region
      %s679 = ssub.s32 %s9, 2
      // Predicated region
      $region41: #{net_forward.4} parent=39 // pred_check
        %p680 = pneg %p106
      $region42: #{net_forward.4} parent=39 // pred_check_branch
        %682 = sbr.rel (%p680) target = $region44
      $region43: #{net_forward.4} parent=39 // pred_region
        %s683 = smul.u32 2, %s15
        %p684 = scmp.lt.s32.totalorder %s683, 3
        %s685 = scalar_select %p684, %s683, 3
        %s686 = smul.addr %s685, 4
        %s687 = scalar_lea.vmem %s3, %s686
      $region44: #{net_forward.4} parent=39 // pred_fallthru
        _
    $region40: #{net_forward.4} parent=5 // pred_fallthru
      _
  $region6: #{net_forward.4} parent=0 // loop_footer
    %s13 = sadd.s32 1, %s9
  $region7: #{net_forward.4} parent=0 // loop_footer_branch
    %8 = sbr.rel target = $region3
  $region8: #{net_forward.4} parent=0 // loop_exit
    _

</llo_original>
